<compile_context>
chip_gen: v6e
topology: v6e:2x2x1
jax: 0.10.0
libtpu: 0.0.40
codegen_flags: <defaults>
</compile_context>

<pallas_src>
import functools

import jax
import jax.numpy as jnp
from jax.experimental import pallas as pl
from jax.experimental.pallas import tpu as pltpu

NEG_SLOPE = 0.01  # F.leaky_relu default


def _leaky_relu(x):
    return jnp.where(x >= 0, x, NEG_SLOPE * x)


def _vmem_spec():
    return pl.BlockSpec(memory_space=pltpu.MemorySpace.VMEM)


# ---------------------------------------------------------------------------
# Fused Pallas kernel: 6x GraphConv (+residual, leaky_relu) -> global_add_pool
# -> Linear/leaky_relu x3 -> Linear (lane-padded logits)
# ---------------------------------------------------------------------------
def gcn_fused_kernel(x_ref, adj_ref, conv_w_ref, conv_b_ref, pool_ref,
                     w1_ref, b1_ref, w2_ref, b2_ref, w3_ref, b3_ref,
                     w4_ref, b4_ref, o_ref, cat_ref, *, num_layers):
    c = x_ref.shape[1]

    adj = adj_ref[...]                       # [N, N] bf16, loaded once, VMEM resident
    h = x_ref[...]                           # [N, C] f32 working activations

    # Unrolled GraphConv stack: out = leaky_relu(W_root x + W_rel (A x) + b) (+ h)
    for layer in range(num_layers):
        hb = h.astype(jnp.bfloat16)
        agg = jnp.dot(adj, hb, preferred_element_type=jnp.float32)       # sum_{j->i} x_j
        # Build [x | A@x] in a bf16 VMEM scratch -> single K = 2C MXU matmul.
        cat_ref[:, :c] = hb
        cat_ref[:, c:] = agg.astype(jnp.bfloat16)
        z = (jnp.dot(cat_ref[...], conv_w_ref[layer],                    # [2C, C] stacked weights
                     preferred_element_type=jnp.float32)
             + conv_b_ref[layer])                                        # [1, C] f32 bias
        a = _leaky_relu(z)
        h = a if layer == 0 else a + h                                   # residual from conv2 on

    # global_add_pool: pooled[g] = sum_{i : batch[i]==g} h[i]  ==  P @ h
    pooled = jnp.dot(pool_ref[...], h.astype(jnp.bfloat16),
                     preferred_element_type=jnp.float32)                 # [G, C] f32

    # MLP head (all operands already VMEM resident).
    y = _leaky_relu(jnp.dot(pooled.astype(jnp.bfloat16), w1_ref[...],
                            preferred_element_type=jnp.float32) + b1_ref[...])
    y = _leaky_relu(jnp.dot(y.astype(jnp.bfloat16), w2_ref[...],
                            preferred_element_type=jnp.float32) + b2_ref[...])
    y = _leaky_relu(jnp.dot(y.astype(jnp.bfloat16), w3_ref[...],
                            preferred_element_type=jnp.float32) + b3_ref[...])
    y = (jnp.dot(y.astype(jnp.bfloat16), w4_ref[...],                    # [64, 128] (lane-padded)
                 preferred_element_type=jnp.float32) + b4_ref[...])
    o_ref[...] = y                                                       # [G, 128], col 0 = logits


def gcn_fused(x_pad, adj, conv_w, conv_b, pool_mat, mlp, *, num_layers):
    n, c = x_pad.shape
    g = pool_mat.shape[0]
    out_pad = mlp["w4"].shape[1]

    args = (x_pad, adj, conv_w, conv_b, pool_mat,
            mlp["w1"], mlp["b1"], mlp["w2"], mlp["b2"],
            mlp["w3"], mlp["b3"], mlp["w4"], mlp["b4"])

    # Explicit VMEM budget: all operands + output + concat scratch, 2x headroom.
    total_bytes = sum(int(a.size) * a.dtype.itemsize for a in args)
    total_bytes += g * out_pad * 4                # output
    total_bytes += n * (2 * c) * 2                # bf16 concat scratch
    vmem_limit = int(min(100 * 1024 * 1024, max(16 * 1024 * 1024, 2 * total_bytes)))

    return pl.pallas_call(
        functools.partial(gcn_fused_kernel, num_layers=num_layers),
        out_shape=jax.ShapeDtypeStruct((g, out_pad), jnp.float32),
        in_specs=[_vmem_spec() for _ in args],
        out_specs=_vmem_spec(),
        scratch_shapes=[pltpu.VMEM((n, 2 * c), jnp.bfloat16)],
        compiler_params=pltpu.CompilerParams(vmem_limit_bytes=vmem_limit),
    )(*args)


# ---------------------------------------------------------------------------
# Parameters (deterministic synthetic init; shapes follow the nn.Module)
# ---------------------------------------------------------------------------
def init_params(key, num_node_features, hidden_channels):
    scale = 0.05

    def dense(k, fan_in, fan_out):
        kw, kb = jax.random.split(k)
        w = jax.random.normal(kw, (fan_in, fan_out), jnp.float32) * scale
        b = jax.random.normal(kb, (1, fan_out), jnp.float32) * scale
        return w, b

    keys = jax.random.split(key, 10)
    conv_dims = [(num_node_features, hidden_channels)] + [(hidden_channels, hidden_channels)] * 5
    convs = []
    for i, (cin, cout) in enumerate(conv_dims):
        kr, ka = jax.random.split(keys[i])
        w_root = jax.random.normal(kr, (cin, cout), jnp.float32) * scale  # lin_root (no bias)
        w_rel, b = dense(ka, cin, cout)                                   # lin_rel (with bias)
        convs.append({"w_root": w_root, "w_rel": w_rel, "b": b})

    lin_dims = [(hidden_channels, 256), (256, 128), (128, 64), (64, 1)]
    lins = []
    for j, (cin, cout) in enumerate(lin_dims):
        w, b = dense(keys[6 + j], cin, cout)   # stored as [in, out] (= torch W.T)
        lins.append({"w": w, "b": b})

    return {"convs": convs, "lins": lins}


def pack_params(params, num_node_features, hidden_channels):
    """Stack/pad parameters into the fused-kernel layout (done once, outside jit)."""
    c = hidden_channels
    assert c % 128 == 0, "hidden_channels must be a multiple of 128 (lane width)"
    assert num_node_features <= c

    conv_ws, conv_bs = [], []
    for conv in params["convs"]:
        cin = conv["w_root"].shape[0]
        w_root, w_rel = conv["w_root"], conv["w_rel"]
        if cin < c:   # zero-pad the tiny input-feature dim up to C (math unchanged)
            w_root = jnp.zeros((c, c), jnp.float32).at[:cin].set(w_root)
            w_rel = jnp.zeros((c, c), jnp.float32).at[:cin].set(w_rel)
        conv_ws.append(jnp.concatenate([w_root, w_rel], axis=0))   # [2C, C]
        conv_bs.append(conv["b"])                                  # [1, C]
    conv_w = jnp.stack(conv_ws, axis=0).astype(jnp.bfloat16)       # [6, 2C, C] bf16
    conv_b = jnp.stack(conv_bs, axis=0)                            # [6, 1, C] f32

    lins = params["lins"]
    out_pad = 128                                                  # lane-dense final store
    w4, b4 = lins[3]["w"], lins[3]["b"]                            # [64, 1], [1, 1]
    w4p = jnp.zeros((w4.shape[0], out_pad), jnp.float32).at[:, : w4.shape[1]].set(w4)
    b4p = jnp.zeros((1, out_pad), jnp.float32).at[:, : b4.shape[1]].set(b4)
    mlp = {
        "w1": lins[0]["w"].astype(jnp.bfloat16), "b1": lins[0]["b"],
        "w2": lins[1]["w"].astype(jnp.bfloat16), "b2": lins[1]["b"],
        "w3": lins[2]["w"].astype(jnp.bfloat16), "b3": lins[2]["b"],
        "w4": w4p.astype(jnp.bfloat16), "b4": b4p,
    }
    return {"conv_w": conv_w, "conv_b": conv_b, "mlp": mlp}


# ---------------------------------------------------------------------------
# Forward pass
# ---------------------------------------------------------------------------
def gcn_forward(packed, x, edge_index, batch, *, num_graphs, hidden_channels):
    n, f = x.shape
    c = hidden_channels

    # Dense adjacency: A[dst, src] += 1 per edge src->dst (GraphConv aggr='add').
    # bf16 is exact for edge multiplicities < 256.
    adj = (jnp.zeros((n, n), jnp.float32)
           .at[edge_index[1], edge_index[0]].add(1.0)
           .astype(jnp.bfloat16))
    # Pooling matrix for global_add_pool: P[g, i] = (batch[i] == g).
    pool_mat = (batch[None, :] ==
                jnp.arange(num_graphs, dtype=batch.dtype)[:, None]).astype(jnp.bfloat16)
    # Zero-pad input features up to C lanes (matching zero-padded weight rows).
    x_pad = jnp.zeros((n, c), jnp.float32).at[:, :f].set(x.astype(jnp.float32))

    out = gcn_fused(x_pad, adj, packed["conv_w"], packed["conv_b"], pool_mat,
                    packed["mlp"], num_layers=packed["conv_w"].shape[0])
    return out[:, :1]   # [num_graphs, 1] logits (rest is lane padding)


# ---------------------------------------------------------------------------
if __name__ == "__main__":
    key = jax.random.PRNGKey(0)
    k_edges_s, k_edges_d, k_x, k_params = jax.random.split(key, 4)

    # Small synthetic graph batch: 2 graphs, 8 nodes each, 48 random edges.
    num_nodes = 16
    num_graphs = 2
    num_edges = 48
    num_node_features = 1
    hidden_channels = 128  # constructor arg of GCN (default 512); small for test

    src = jax.random.randint(k_edges_s, (num_edges,), 0, num_nodes, dtype=jnp.int32)
    dst = jax.random.randint(k_edges_d, (num_edges,), 0, num_nodes, dtype=jnp.int32)
    edge_index = jnp.stack([src, dst], axis=0)                               # [2, E]
    x = jax.random.normal(k_x, (num_nodes, num_node_features), jnp.float32)  # [N, F]
    batch = jnp.concatenate([
        jnp.zeros(num_nodes // 2, jnp.int32),
        jnp.ones(num_nodes - num_nodes // 2, jnp.int32),
    ])                                                                        # [N]

    params = init_params(k_params, num_node_features, hidden_channels)
    packed = pack_params(params, num_node_features, hidden_channels)

    fwd = jax.jit(functools.partial(gcn_forward, num_graphs=num_graphs,
                                    hidden_channels=hidden_channels))
    out = fwd(packed, x, edge_index, batch)
    jax.block_until_ready(out)
    assert out.shape == (num_graphs, 1)
    print("KERNEL_OK")
</pallas_src>

<mosaic_0001>
module attributes {stable_mosaic.version = 11 : i64} {
  func.func private @main(%arg0: i32) attributes {dimension_semantics = [#tpu.dimension_semantics<core_parallel>], iteration_bounds = array<i64: 2>, tpu.core_type = #tpu.core_type<sc_scalar_subcore>, window_params = []} {
    return
  }
}

module attributes {stable_mosaic.version = 11 : i64} {
  func.func private @main(%arg0: i32) attributes {dimension_semantics = [#tpu.dimension_semantics<core_parallel>], iteration_bounds = array<i64: 2>, tpu.core_type = #tpu.core_type<sc_scalar_subcore>, window_params = []} {
    return
  }
}

module attributes {stable_mosaic.version = 11 : i64} {
  func.func @gcn_fused_kernel(%arg0: memref<16x128xf32, #tpu.memory_space<vmem>>, %arg1: memref<16x16xbf16, #tpu.memory_space<vmem>>, %arg2: memref<6x256x128xbf16, #tpu.memory_space<vmem>>, %arg3: memref<6x1x128xf32, #tpu.memory_space<vmem>>, %arg4: memref<2x16xbf16, #tpu.memory_space<vmem>>, %arg5: memref<128x256xbf16, #tpu.memory_space<vmem>>, %arg6: memref<1x256xf32, #tpu.memory_space<vmem>>, %arg7: memref<256x128xbf16, #tpu.memory_space<vmem>>, %arg8: memref<1x128xf32, #tpu.memory_space<vmem>>, %arg9: memref<128x64xbf16, #tpu.memory_space<vmem>>, %arg10: memref<1x64xf32, #tpu.memory_space<vmem>>, %arg11: memref<64x128xbf16, #tpu.memory_space<vmem>>, %arg12: memref<1x128xf32, #tpu.memory_space<vmem>>, %arg13: memref<2x128xf32, #tpu.memory_space<vmem>>, %arg14: memref<16x256xbf16, #tpu.memory_space<vmem>>) attributes {dimension_semantics = [], scalar_prefetch = 0 : i64, scratch_operands = 1 : i64, tpu.core_type = #tpu.core_type<tc>} {
    %c0 = arith.constant 0 : index
    %c0_0 = arith.constant 0 : index
    %0 = vector.load %arg1[%c0, %c0_0] : memref<16x16xbf16, #tpu.memory_space<vmem>>, vector<16x16xbf16>
    %c0_1 = arith.constant 0 : index
    %c0_2 = arith.constant 0 : index
    %1 = vector.load %arg0[%c0_1, %c0_2] : memref<16x128xf32, #tpu.memory_space<vmem>>, vector<16x128xf32>
    %2 = arith.truncf %1 : vector<16x128xf32> to vector<16x128xbf16>
    %cst = arith.constant dense<0.000000e+00> : vector<16x128xf32>
    %3 = tpu.matmul %0, %2, %cst {dimension_numbers = #tpu.dot_dimension_numbers<[1], [0], [0], [1], [0, 0, 1, 1], [], []>} : vector<16x16xbf16>, vector<16x128xbf16>, vector<16x128xf32> -> vector<16x128xf32>
    %c0_3 = arith.constant 0 : index
    %c0_4 = arith.constant 0 : index
    %4 = vector.load %arg14[%c0_3, %c0_4] : memref<16x256xbf16, #tpu.memory_space<vmem>>, vector<16x128xbf16>
    tpu.vector_store %arg14[%c0_3, %c0_4], %2 {strides = array<i32>} : memref<16x256xbf16, #tpu.memory_space<vmem>>, vector<16x128xbf16>,
    %5 = arith.truncf %3 : vector<16x128xf32> to vector<16x128xbf16>
    %c0_5 = arith.constant 0 : index
    %c128 = arith.constant 128 : index
    %6 = vector.load %arg14[%c0_5, %c128] : memref<16x256xbf16, #tpu.memory_space<vmem>>, vector<16x128xbf16>
    tpu.vector_store %arg14[%c0_5, %c128], %5 {strides = array<i32>} : memref<16x256xbf16, #tpu.memory_space<vmem>>, vector<16x128xbf16>,
    %c0_6 = arith.constant 0 : index
    %c0_7 = arith.constant 0 : index
    %7 = vector.load %arg14[%c0_6, %c0_7] : memref<16x256xbf16, #tpu.memory_space<vmem>>, vector<16x256xbf16>
    %c0_8 = arith.constant 0 : index
    %c0_9 = arith.constant 0 : index
    %c0_10 = arith.constant 0 : index
    %8 = vector.load %arg2[%c0_8, %c0_9, %c0_10] : memref<6x256x128xbf16, #tpu.memory_space<vmem>>, vector<1x256x128xbf16>
    %9 = vector.shape_cast %8 : vector<1x256x128xbf16> to vector<256x128xbf16>
    %cst_11 = arith.constant dense<0.000000e+00> : vector<16x128xf32>
    %10 = tpu.matmul %7, %9, %cst_11 {dimension_numbers = #tpu.dot_dimension_numbers<[1], [0], [0], [1], [0, 0, 1, 1], [], []>} : vector<16x256xbf16>, vector<256x128xbf16>, vector<16x128xf32> -> vector<16x128xf32>
    %c0_12 = arith.constant 0 : index
    %c0_13 = arith.constant 0 : index
    %c0_14 = arith.constant 0 : index
    %11 = vector.load %arg3[%c0_12, %c0_13, %c0_14] : memref<6x1x128xf32, #tpu.memory_space<vmem>>, vector<1x1x128xf32>
    %12 = vector.shape_cast %11 : vector<1x1x128xf32> to vector<1x128xf32>
    %13 = vector.broadcast %12 : vector<1x128xf32> to vector<16x128xf32>
    %14 = arith.addf %10, %13 : vector<16x128xf32>
    %cst_15 = arith.constant 0.000000e+00 : f32
    %15 = vector.broadcast %cst_15 : f32 to vector<16x128xf32>
    %16 = arith.cmpf oge, %14, %15 : vector<16x128xf32>
    %cst_16 = arith.constant 0.00999999977 : f32
    %17 = vector.broadcast %cst_16 : f32 to vector<16x128xf32>
    %18 = arith.mulf %17, %14 : vector<16x128xf32>
    %19 = arith.select %16, %14, %18 : vector<16x128xi1>, vector<16x128xf32>
    %20 = arith.truncf %19 : vector<16x128xf32> to vector<16x128xbf16>
    %cst_17 = arith.constant dense<0.000000e+00> : vector<16x128xf32>
    %21 = tpu.matmul %0, %20, %cst_17 {dimension_numbers = #tpu.dot_dimension_numbers<[1], [0], [0], [1], [0, 0, 1, 1], [], []>} : vector<16x16xbf16>, vector<16x128xbf16>, vector<16x128xf32> -> vector<16x128xf32>
    %c0_18 = arith.constant 0 : index
    %c0_19 = arith.constant 0 : index
    %22 = vector.load %arg14[%c0_18, %c0_19] : memref<16x256xbf16, #tpu.memory_space<vmem>>, vector<16x128xbf16>
    tpu.vector_store %arg14[%c0_18, %c0_19], %20 {strides = array<i32>} : memref<16x256xbf16, #tpu.memory_space<vmem>>, vector<16x128xbf16>,
    %23 = arith.truncf %21 : vector<16x128xf32> to vector<16x128xbf16>
    %c0_20 = arith.constant 0 : index
    %c128_21 = arith.constant 128 : index
    %24 = vector.load %arg14[%c0_20, %c128_21] : memref<16x256xbf16, #tpu.memory_space<vmem>>, vector<16x128xbf16>
    tpu.vector_store %arg14[%c0_20, %c128_21], %23 {strides = array<i32>} : memref<16x256xbf16, #tpu.memory_space<vmem>>, vector<16x128xbf16>,
    %c0_22 = arith.constant 0 : index
    %c0_23 = arith.constant 0 : index
    %25 = vector.load %arg14[%c0_22, %c0_23] : memref<16x256xbf16, #tpu.memory_space<vmem>>, vector<16x256xbf16>
    %c1 = arith.constant 1 : index
    %c0_24 = arith.constant 0 : index
    %c0_25 = arith.constant 0 : index
    %26 = vector.load %arg2[%c1, %c0_24, %c0_25] : memref<6x256x128xbf16, #tpu.memory_space<vmem>>, vector<1x256x128xbf16>
    %27 = vector.shape_cast %26 : vector<1x256x128xbf16> to vector<256x128xbf16>
    %cst_26 = arith.constant dense<0.000000e+00> : vector<16x128xf32>
    %28 = tpu.matmul %25, %27, %cst_26 {dimension_numbers = #tpu.dot_dimension_numbers<[1], [0], [0], [1], [0, 0, 1, 1], [], []>} : vector<16x256xbf16>, vector<256x128xbf16>, vector<16x128xf32> -> vector<16x128xf32>
    %c1_27 = arith.constant 1 : index
    %c0_28 = arith.constant 0 : index
    %c0_29 = arith.constant 0 : index
    %29 = vector.load %arg3[%c1_27, %c0_28, %c0_29] : memref<6x1x128xf32, #tpu.memory_space<vmem>>, vector<1x1x128xf32>
    %30 = vector.shape_cast %29 : vector<1x1x128xf32> to vector<1x128xf32>
    %31 = vector.broadcast %30 : vector<1x128xf32> to vector<16x128xf32>
    %32 = arith.addf %28, %31 : vector<16x128xf32>
    %cst_30 = arith.constant 0.000000e+00 : f32
    %33 = vector.broadcast %cst_30 : f32 to vector<16x128xf32>
    %34 = arith.cmpf oge, %32, %33 : vector<16x128xf32>
    %cst_31 = arith.constant 0.00999999977 : f32
    %35 = vector.broadcast %cst_31 : f32 to vector<16x128xf32>
    %36 = arith.mulf %35, %32 : vector<16x128xf32>
    %37 = arith.select %34, %32, %36 : vector<16x128xi1>, vector<16x128xf32>
    %38 = arith.addf %37, %19 : vector<16x128xf32>
    %39 = arith.truncf %38 : vector<16x128xf32> to vector<16x128xbf16>
    %cst_32 = arith.constant dense<0.000000e+00> : vector<16x128xf32>
    %40 = tpu.matmul %0, %39, %cst_32 {dimension_numbers = #tpu.dot_dimension_numbers<[1], [0], [0], [1], [0, 0, 1, 1], [], []>} : vector<16x16xbf16>, vector<16x128xbf16>, vector<16x128xf32> -> vector<16x128xf32>
    %c0_33 = arith.constant 0 : index
    %c0_34 = arith.constant 0 : index
    %41 = vector.load %arg14[%c0_33, %c0_34] : memref<16x256xbf16, #tpu.memory_space<vmem>>, vector<16x128xbf16>
    tpu.vector_store %arg14[%c0_33, %c0_34], %39 {strides = array<i32>} : memref<16x256xbf16, #tpu.memory_space<vmem>>, vector<16x128xbf16>,
    %42 = arith.truncf %40 : vector<16x128xf32> to vector<16x128xbf16>
    %c0_35 = arith.constant 0 : index
    %c128_36 = arith.constant 128 : index
    %43 = vector.load %arg14[%c0_35, %c128_36] : memref<16x256xbf16, #tpu.memory_space<vmem>>, vector<16x128xbf16>
    tpu.vector_store %arg14[%c0_35, %c128_36], %42 {strides = array<i32>} : memref<16x256xbf16, #tpu.memory_space<vmem>>, vector<16x128xbf16>,
    %c0_37 = arith.constant 0 : index
    %c0_38 = arith.constant 0 : index
    %44 = vector.load %arg14[%c0_37, %c0_38] : memref<16x256xbf16, #tpu.memory_space<vmem>>, vector<16x256xbf16>
    %c2 = arith.constant 2 : index
    %c0_39 = arith.constant 0 : index
    %c0_40 = arith.constant 0 : index
    %45 = vector.load %arg2[%c2, %c0_39, %c0_40] : memref<6x256x128xbf16, #tpu.memory_space<vmem>>, vector<1x256x128xbf16>
    %46 = vector.shape_cast %45 : vector<1x256x128xbf16> to vector<256x128xbf16>
    %cst_41 = arith.constant dense<0.000000e+00> : vector<16x128xf32>
    %47 = tpu.matmul %44, %46, %cst_41 {dimension_numbers = #tpu.dot_dimension_numbers<[1], [0], [0], [1], [0, 0, 1, 1], [], []>} : vector<16x256xbf16>, vector<256x128xbf16>, vector<16x128xf32> -> vector<16x128xf32>
    %c2_42 = arith.constant 2 : index
    %c0_43 = arith.constant 0 : index
    %c0_44 = arith.constant 0 : index
    %48 = vector.load %arg3[%c2_42, %c0_43, %c0_44] : memref<6x1x128xf32, #tpu.memory_space<vmem>>, vector<1x1x128xf32>
    %49 = vector.shape_cast %48 : vector<1x1x128xf32> to vector<1x128xf32>
    %50 = vector.broadcast %49 : vector<1x128xf32> to vector<16x128xf32>
    %51 = arith.addf %47, %50 : vector<16x128xf32>
    %cst_45 = arith.constant 0.000000e+00 : f32
    %52 = vector.broadcast %cst_45 : f32 to vector<16x128xf32>
    %53 = arith.cmpf oge, %51, %52 : vector<16x128xf32>
    %cst_46 = arith.constant 0.00999999977 : f32
    %54 = vector.broadcast %cst_46 : f32 to vector<16x128xf32>
    %55 = arith.mulf %54, %51 : vector<16x128xf32>
    %56 = arith.select %53, %51, %55 : vector<16x128xi1>, vector<16x128xf32>
    %57 = arith.addf %56, %38 : vector<16x128xf32>
    %58 = arith.truncf %57 : vector<16x128xf32> to vector<16x128xbf16>
    %cst_47 = arith.constant dense<0.000000e+00> : vector<16x128xf32>
    %59 = tpu.matmul %0, %58, %cst_47 {dimension_numbers = #tpu.dot_dimension_numbers<[1], [0], [0], [1], [0, 0, 1, 1], [], []>} : vector<16x16xbf16>, vector<16x128xbf16>, vector<16x128xf32> -> vector<16x128xf32>
    %c0_48 = arith.constant 0 : index
    %c0_49 = arith.constant 0 : index
    %60 = vector.load %arg14[%c0_48, %c0_49] : memref<16x256xbf16, #tpu.memory_space<vmem>>, vector<16x128xbf16>
    tpu.vector_store %arg14[%c0_48, %c0_49], %58 {strides = array<i32>} : memref<16x256xbf16, #tpu.memory_space<vmem>>, vector<16x128xbf16>,
    %61 = arith.truncf %59 : vector<16x128xf32> to vector<16x128xbf16>
    %c0_50 = arith.constant 0 : index
    %c128_51 = arith.constant 128 : index
    %62 = vector.load %arg14[%c0_50, %c128_51] : memref<16x256xbf16, #tpu.memory_space<vmem>>, vector<16x128xbf16>
    tpu.vector_store %arg14[%c0_50, %c128_51], %61 {strides = array<i32>} : memref<16x256xbf16, #tpu.memory_space<vmem>>, vector<16x128xbf16>,
    %c0_52 = arith.constant 0 : index
    %c0_53 = arith.constant 0 : index
    %63 = vector.load %arg14[%c0_52, %c0_53] : memref<16x256xbf16, #tpu.memory_space<vmem>>, vector<16x256xbf16>
    %c3 = arith.constant 3 : index
    %c0_54 = arith.constant 0 : index
    %c0_55 = arith.constant 0 : index
    %64 = vector.load %arg2[%c3, %c0_54, %c0_55] : memref<6x256x128xbf16, #tpu.memory_space<vmem>>, vector<1x256x128xbf16>
    %65 = vector.shape_cast %64 : vector<1x256x128xbf16> to vector<256x128xbf16>
    %cst_56 = arith.constant dense<0.000000e+00> : vector<16x128xf32>
    %66 = tpu.matmul %63, %65, %cst_56 {dimension_numbers = #tpu.dot_dimension_numbers<[1], [0], [0], [1], [0, 0, 1, 1], [], []>} : vector<16x256xbf16>, vector<256x128xbf16>, vector<16x128xf32> -> vector<16x128xf32>
    %c3_57 = arith.constant 3 : index
    %c0_58 = arith.constant 0 : index
    %c0_59 = arith.constant 0 : index
    %67 = vector.load %arg3[%c3_57, %c0_58, %c0_59] : memref<6x1x128xf32, #tpu.memory_space<vmem>>, vector<1x1x128xf32>
    %68 = vector.shape_cast %67 : vector<1x1x128xf32> to vector<1x128xf32>
    %69 = vector.broadcast %68 : vector<1x128xf32> to vector<16x128xf32>
    %70 = arith.addf %66, %69 : vector<16x128xf32>
    %cst_60 = arith.constant 0.000000e+00 : f32
    %71 = vector.broadcast %cst_60 : f32 to vector<16x128xf32>
    %72 = arith.cmpf oge, %70, %71 : vector<16x128xf32>
    %cst_61 = arith.constant 0.00999999977 : f32
    %73 = vector.broadcast %cst_61 : f32 to vector<16x128xf32>
    %74 = arith.mulf %73, %70 : vector<16x128xf32>
    %75 = arith.select %72, %70, %74 : vector<16x128xi1>, vector<16x128xf32>
    %76 = arith.addf %75, %57 : vector<16x128xf32>
    %77 = arith.truncf %76 : vector<16x128xf32> to vector<16x128xbf16>
    %cst_62 = arith.constant dense<0.000000e+00> : vector<16x128xf32>
    %78 = tpu.matmul %0, %77, %cst_62 {dimension_numbers = #tpu.dot_dimension_numbers<[1], [0], [0], [1], [0, 0, 1, 1], [], []>} : vector<16x16xbf16>, vector<16x128xbf16>, vector<16x128xf32> -> vector<16x128xf32>
    %c0_63 = arith.constant 0 : index
    %c0_64 = arith.constant 0 : index
    %79 = vector.load %arg14[%c0_63, %c0_64] : memref<16x256xbf16, #tpu.memory_space<vmem>>, vector<16x128xbf16>
    tpu.vector_store %arg14[%c0_63, %c0_64], %77 {strides = array<i32>} : memref<16x256xbf16, #tpu.memory_space<vmem>>, vector<16x128xbf16>,
    %80 = arith.truncf %78 : vector<16x128xf32> to vector<16x128xbf16>
    %c0_65 = arith.constant 0 : index
    %c128_66 = arith.constant 128 : index
    %81 = vector.load %arg14[%c0_65, %c128_66] : memref<16x256xbf16, #tpu.memory_space<vmem>>, vector<16x128xbf16>
    tpu.vector_store %arg14[%c0_65, %c128_66], %80 {strides = array<i32>} : memref<16x256xbf16, #tpu.memory_space<vmem>>, vector<16x128xbf16>,
    %c0_67 = arith.constant 0 : index
    %c0_68 = arith.constant 0 : index
    %82 = vector.load %arg14[%c0_67, %c0_68] : memref<16x256xbf16, #tpu.memory_space<vmem>>, vector<16x256xbf16>
    %c4 = arith.constant 4 : index
    %c0_69 = arith.constant 0 : index
    %c0_70 = arith.constant 0 : index
    %83 = vector.load %arg2[%c4, %c0_69, %c0_70] : memref<6x256x128xbf16, #tpu.memory_space<vmem>>, vector<1x256x128xbf16>
    %84 = vector.shape_cast %83 : vector<1x256x128xbf16> to vector<256x128xbf16>
    %cst_71 = arith.constant dense<0.000000e+00> : vector<16x128xf32>
    %85 = tpu.matmul %82, %84, %cst_71 {dimension_numbers = #tpu.dot_dimension_numbers<[1], [0], [0], [1], [0, 0, 1, 1], [], []>} : vector<16x256xbf16>, vector<256x128xbf16>, vector<16x128xf32> -> vector<16x128xf32>
    %c4_72 = arith.constant 4 : index
    %c0_73 = arith.constant 0 : index
    %c0_74 = arith.constant 0 : index
    %86 = vector.load %arg3[%c4_72, %c0_73, %c0_74] : memref<6x1x128xf32, #tpu.memory_space<vmem>>, vector<1x1x128xf32>
    %87 = vector.shape_cast %86 : vector<1x1x128xf32> to vector<1x128xf32>
    %88 = vector.broadcast %87 : vector<1x128xf32> to vector<16x128xf32>
    %89 = arith.addf %85, %88 : vector<16x128xf32>
    %cst_75 = arith.constant 0.000000e+00 : f32
    %90 = vector.broadcast %cst_75 : f32 to vector<16x128xf32>
    %91 = arith.cmpf oge, %89, %90 : vector<16x128xf32>
    %cst_76 = arith.constant 0.00999999977 : f32
    %92 = vector.broadcast %cst_76 : f32 to vector<16x128xf32>
    %93 = arith.mulf %92, %89 : vector<16x128xf32>
    %94 = arith.select %91, %89, %93 : vector<16x128xi1>, vector<16x128xf32>
    %95 = arith.addf %94, %76 : vector<16x128xf32>
    %96 = arith.truncf %95 : vector<16x128xf32> to vector<16x128xbf16>
    %cst_77 = arith.constant dense<0.000000e+00> : vector<16x128xf32>
    %97 = tpu.matmul %0, %96, %cst_77 {dimension_numbers = #tpu.dot_dimension_numbers<[1], [0], [0], [1], [0, 0, 1, 1], [], []>} : vector<16x16xbf16>, vector<16x128xbf16>, vector<16x128xf32> -> vector<16x128xf32>
    %c0_78 = arith.constant 0 : index
    %c0_79 = arith.constant 0 : index
    %98 = vector.load %arg14[%c0_78, %c0_79] : memref<16x256xbf16, #tpu.memory_space<vmem>>, vector<16x128xbf16>
    tpu.vector_store %arg14[%c0_78, %c0_79], %96 {strides = array<i32>} : memref<16x256xbf16, #tpu.memory_space<vmem>>, vector<16x128xbf16>,
    %99 = arith.truncf %97 : vector<16x128xf32> to vector<16x128xbf16>
    %c0_80 = arith.constant 0 : index
    %c128_81 = arith.constant 128 : index
    %100 = vector.load %arg14[%c0_80, %c128_81] : memref<16x256xbf16, #tpu.memory_space<vmem>>, vector<16x128xbf16>
    tpu.vector_store %arg14[%c0_80, %c128_81], %99 {strides = array<i32>} : memref<16x256xbf16, #tpu.memory_space<vmem>>, vector<16x128xbf16>,
    %c0_82 = arith.constant 0 : index
    %c0_83 = arith.constant 0 : index
    %101 = vector.load %arg14[%c0_82, %c0_83] : memref<16x256xbf16, #tpu.memory_space<vmem>>, vector<16x256xbf16>
    %c5 = arith.constant 5 : index
    %c0_84 = arith.constant 0 : index
    %c0_85 = arith.constant 0 : index
    %102 = vector.load %arg2[%c5, %c0_84, %c0_85] : memref<6x256x128xbf16, #tpu.memory_space<vmem>>, vector<1x256x128xbf16>
    %103 = vector.shape_cast %102 : vector<1x256x128xbf16> to vector<256x128xbf16>
    %cst_86 = arith.constant dense<0.000000e+00> : vector<16x128xf32>
    %104 = tpu.matmul %101, %103, %cst_86 {dimension_numbers = #tpu.dot_dimension_numbers<[1], [0], [0], [1], [0, 0, 1, 1], [], []>} : vector<16x256xbf16>, vector<256x128xbf16>, vector<16x128xf32> -> vector<16x128xf32>
    %c5_87 = arith.constant 5 : index
    %c0_88 = arith.constant 0 : index
    %c0_89 = arith.constant 0 : index
    %105 = vector.load %arg3[%c5_87, %c0_88, %c0_89] : memref<6x1x128xf32, #tpu.memory_space<vmem>>, vector<1x1x128xf32>
    %106 = vector.shape_cast %105 : vector<1x1x128xf32> to vector<1x128xf32>
    %107 = vector.broadcast %106 : vector<1x128xf32> to vector<16x128xf32>
    %108 = arith.addf %104, %107 : vector<16x128xf32>
    %cst_90 = arith.constant 0.000000e+00 : f32
    %109 = vector.broadcast %cst_90 : f32 to vector<16x128xf32>
    %110 = arith.cmpf oge, %108, %109 : vector<16x128xf32>
    %cst_91 = arith.constant 0.00999999977 : f32
    %111 = vector.broadcast %cst_91 : f32 to vector<16x128xf32>
    %112 = arith.mulf %111, %108 : vector<16x128xf32>
    %113 = arith.select %110, %108, %112 : vector<16x128xi1>, vector<16x128xf32>
    %114 = arith.addf %113, %95 : vector<16x128xf32>
    %c0_92 = arith.constant 0 : index
    %c0_93 = arith.constant 0 : index
    %115 = vector.load %arg4[%c0_92, %c0_93] : memref<2x16xbf16, #tpu.memory_space<vmem>>, vector<2x16xbf16>
    %116 = arith.truncf %114 : vector<16x128xf32> to vector<16x128xbf16>
    %cst_94 = arith.constant dense<0.000000e+00> : vector<2x128xf32>
    %117 = tpu.matmul %115, %116, %cst_94 {dimension_numbers = #tpu.dot_dimension_numbers<[1], [0], [0], [1], [0, 0, 1, 1], [], []>} : vector<2x16xbf16>, vector<16x128xbf16>, vector<2x128xf32> -> vector<2x128xf32>
    %118 = arith.truncf %117 : vector<2x128xf32> to vector<2x128xbf16>
    %c0_95 = arith.constant 0 : index
    %c0_96 = arith.constant 0 : index
    %119 = vector.load %arg5[%c0_95, %c0_96] : memref<128x256xbf16, #tpu.memory_space<vmem>>, vector<128x256xbf16>
    %cst_97 = arith.constant dense<0.000000e+00> : vector<2x256xf32>
    %120 = tpu.matmul %118, %119, %cst_97 {dimension_numbers = #tpu.dot_dimension_numbers<[1], [0], [0], [1], [0, 0, 1, 1], [], []>} : vector<2x128xbf16>, vector<128x256xbf16>, vector<2x256xf32> -> vector<2x256xf32>
    %c0_98 = arith.constant 0 : index
    %c0_99 = arith.constant 0 : index
    %121 = vector.load %arg6[%c0_98, %c0_99] : memref<1x256xf32, #tpu.memory_space<vmem>>, vector<1x256xf32>
    %122 = vector.broadcast %121 : vector<1x256xf32> to vector<2x256xf32>
    %123 = arith.addf %120, %122 : vector<2x256xf32>
    %cst_100 = arith.constant 0.000000e+00 : f32
    %124 = vector.broadcast %cst_100 : f32 to vector<2x256xf32>
    %125 = arith.cmpf oge, %123, %124 : vector<2x256xf32>
    %cst_101 = arith.constant 0.00999999977 : f32
    %126 = vector.broadcast %cst_101 : f32 to vector<2x256xf32>
    %127 = arith.mulf %126, %123 : vector<2x256xf32>
    %128 = arith.select %125, %123, %127 : vector<2x256xi1>, vector<2x256xf32>
    %129 = arith.truncf %128 : vector<2x256xf32> to vector<2x256xbf16>
    %c0_102 = arith.constant 0 : index
    %c0_103 = arith.constant 0 : index
    %130 = vector.load %arg7[%c0_102, %c0_103] : memref<256x128xbf16, #tpu.memory_space<vmem>>, vector<256x128xbf16>
    %cst_104 = arith.constant dense<0.000000e+00> : vector<2x128xf32>
    %131 = tpu.matmul %129, %130, %cst_104 {dimension_numbers = #tpu.dot_dimension_numbers<[1], [0], [0], [1], [0, 0, 1, 1], [], []>} : vector<2x256xbf16>, vector<256x128xbf16>, vector<2x128xf32> -> vector<2x128xf32>
    %c0_105 = arith.constant 0 : index
    %c0_106 = arith.constant 0 : index
    %132 = vector.load %arg8[%c0_105, %c0_106] : memref<1x128xf32, #tpu.memory_space<vmem>>, vector<1x128xf32>
    %133 = vector.broadcast %132 : vector<1x128xf32> to vector<2x128xf32>
    %134 = arith.addf %131, %133 : vector<2x128xf32>
    %cst_107 = arith.constant 0.000000e+00 : f32
    %135 = vector.broadcast %cst_107 : f32 to vector<2x128xf32>
    %136 = arith.cmpf oge, %134, %135 : vector<2x128xf32>
    %cst_108 = arith.constant 0.00999999977 : f32
    %137 = vector.broadcast %cst_108 : f32 to vector<2x128xf32>
    %138 = arith.mulf %137, %134 : vector<2x128xf32>
    %139 = arith.select %136, %134, %138 : vector<2x128xi1>, vector<2x128xf32>
    %140 = arith.truncf %139 : vector<2x128xf32> to vector<2x128xbf16>
    %c0_109 = arith.constant 0 : index
    %c0_110 = arith.constant 0 : index
    %141 = vector.load %arg9[%c0_109, %c0_110] : memref<128x64xbf16, #tpu.memory_space<vmem>>, vector<128x64xbf16>
    %cst_111 = arith.constant dense<0.000000e+00> : vector<2x64xf32>
    %142 = tpu.matmul %140, %141, %cst_111 {dimension_numbers = #tpu.dot_dimension_numbers<[1], [0], [0], [1], [0, 0, 1, 1], [], []>} : vector<2x128xbf16>, vector<128x64xbf16>, vector<2x64xf32> -> vector<2x64xf32>
    %c0_112 = arith.constant 0 : index
    %c0_113 = arith.constant 0 : index
    %143 = vector.load %arg10[%c0_112, %c0_113] : memref<1x64xf32, #tpu.memory_space<vmem>>, vector<1x64xf32>
    %144 = vector.broadcast %143 : vector<1x64xf32> to vector<2x64xf32>
    %145 = arith.addf %142, %144 : vector<2x64xf32>
    %cst_114 = arith.constant 0.000000e+00 : f32
    %146 = vector.broadcast %cst_114 : f32 to vector<2x64xf32>
    %147 = arith.cmpf oge, %145, %146 : vector<2x64xf32>
    %cst_115 = arith.constant 0.00999999977 : f32
    %148 = vector.broadcast %cst_115 : f32 to vector<2x64xf32>
    %149 = arith.mulf %148, %145 : vector<2x64xf32>
    %150 = arith.select %147, %145, %149 : vector<2x64xi1>, vector<2x64xf32>
    %151 = arith.truncf %150 : vector<2x64xf32> to vector<2x64xbf16>
    %c0_116 = arith.constant 0 : index
    %c0_117 = arith.constant 0 : index
    %152 = vector.load %arg11[%c0_116, %c0_117] : memref<64x128xbf16, #tpu.memory_space<vmem>>, vector<64x128xbf16>
    %cst_118 = arith.constant dense<0.000000e+00> : vector<2x128xf32>
    %153 = tpu.matmul %151, %152, %cst_118 {dimension_numbers = #tpu.dot_dimension_numbers<[1], [0], [0], [1], [0, 0, 1, 1], [], []>} : vector<2x64xbf16>, vector<64x128xbf16>, vector<2x128xf32> -> vector<2x128xf32>
    %c0_119 = arith.constant 0 : index
    %c0_120 = arith.constant 0 : index
    %154 = vector.load %arg12[%c0_119, %c0_120] : memref<1x128xf32, #tpu.memory_space<vmem>>, vector<1x128xf32>
    %155 = vector.broadcast %154 : vector<1x128xf32> to vector<2x128xf32>
    %156 = arith.addf %153, %155 : vector<2x128xf32>
    %c0_121 = arith.constant 0 : index
    %c0_122 = arith.constant 0 : index
    %157 = vector.load %arg13[%c0_121, %c0_122] : memref<2x128xf32, #tpu.memory_space<vmem>>, vector<2x128xf32>
    tpu.vector_store %arg13[%c0_121, %c0_122], %156 {strides = array<i32>} : memref<2x128xf32, #tpu.memory_space<vmem>>, vector<2x128xf32>,
    return
  }
}

</mosaic_0001>

<llo_original>
// kernel: gcn_forward.1
$region0: #{gcn_forward.1}
  #allocation0 [shape = 'u32[]', space=smem, size = 0x4, offset = 0x4, fixed_abs, tag = 'smem constant byte address 0x4 - core index']
  #allocation1 [shape = 'u32[144,128]{1,0:T(1,128)}', space=vmem, size = 0x12000, scoped, tag = 'internal scratch']
  #allocation2 [shape = 'bf16[16,256]{1,0:T(8,128)(2,1)}', space=vmem, size = 0x2000, scoped, tag = 'scratch operand']
  %s0 = inlined_call_operand.vmem [shape: f32[16,128], index: 0, kind: input, shape index: {}]
  %s1 = inlined_call_operand.vmem [shape: bf16[16,16], index: 1, kind: input, shape index: {}]
  %s2 = inlined_call_operand.vmem [shape: bf16[6,256,128], index: 2, kind: input, shape index: {}]
  %s3 = inlined_call_operand.vmem [shape: f32[6,1,128], index: 3, kind: input, shape index: {}]
  %s4 = inlined_call_operand.vmem [shape: bf16[2,16], index: 4, kind: input, shape index: {}]
  %s5 = inlined_call_operand.vmem [shape: bf16[128,256], index: 5, kind: input, shape index: {}]
  %s6 = inlined_call_operand.vmem [shape: f32[1,256], index: 6, kind: input, shape index: {}]
  %s7 = inlined_call_operand.vmem [shape: bf16[256,128], index: 7, kind: input, shape index: {}]
  %s8 = inlined_call_operand.vmem [shape: f32[1,128], index: 8, kind: input, shape index: {}]
  %s9 = inlined_call_operand.vmem [shape: bf16[128,64], index: 9, kind: input, shape index: {}]
  %s10 = inlined_call_operand.vmem [shape: f32[1,64], index: 10, kind: input, shape index: {}]
  %s11 = inlined_call_operand.vmem [shape: bf16[64,128], index: 11, kind: input, shape index: {}]
  %s12 = inlined_call_operand.vmem [shape: f32[1,128], index: 12, kind: input, shape index: {}]
  %s13 = inlined_call_operand.vmem [shape: f32[2,128], index: 13, kind: output, shape index: {}]
  %s14 = sld [smem:[#allocation0]]
  $region62: #{gcn_forward.1} parent=0
    _
  %s16 = ssub.s32 1, %s14
  %s17 = scalar_select 0, %s16, %s14
  // Predicated region
  $region2: #{gcn_forward.1} parent=0 // pred_check
    _
  $region3: #{gcn_forward.1} parent=0 // pred_check_branch
    %19 = sbr.rel (0) target = $region5
  $region4: #{gcn_forward.1} parent=0 // pred_region
    _
  $region5: #{gcn_forward.1} parent=0 // pred_fallthru
    _
  // Predicated region
  $region6: #{gcn_forward.1} parent=0 // pred_check
    _
  $region7: #{gcn_forward.1} parent=0 // pred_check_branch
    %21 = sbr.rel (0) target = $region9
  $region8: #{gcn_forward.1} parent=0 // pred_region
    _
  $region9: #{gcn_forward.1} parent=0 // pred_fallthru
    _
  // Predicated region
  $region10: #{gcn_forward.1} parent=0 // pred_check
    _
  $region11: #{gcn_forward.1} parent=0 // pred_check_branch
    %23 = sbr.rel (0) target = $region13
  $region12: #{gcn_forward.1} parent=0 // pred_region
    _
  $region13: #{gcn_forward.1} parent=0 // pred_fallthru
    _
  // Predicated region
  $region14: #{gcn_forward.1} parent=0 // pred_check
    _
  $region15: #{gcn_forward.1} parent=0 // pred_check_branch
    %25 = sbr.rel (0) target = $region17
  $region16: #{gcn_forward.1} parent=0 // pred_region
    _
  $region17: #{gcn_forward.1} parent=0 // pred_fallthru
    _
  // Predicated region
  $region18: #{gcn_forward.1} parent=0 // pred_check
    _
  $region19: #{gcn_forward.1} parent=0 // pred_check_branch
    %27 = sbr.rel (0) target = $region21
  $region20: #{gcn_forward.1} parent=0 // pred_region
    _
  $region21: #{gcn_forward.1} parent=0 // pred_fallthru
    _
  // Predicated region
  $region22: #{gcn_forward.1} parent=0 // pred_check
    _
  $region23: #{gcn_forward.1} parent=0 // pred_check_branch
    %29 = sbr.rel (0) target = $region25
  $region24: #{gcn_forward.1} parent=0 // pred_region
    _
  $region25: #{gcn_forward.1} parent=0 // pred_fallthru
    _
  // Predicated region
  $region26: #{gcn_forward.1} parent=0 // pred_check
    _
  $region27: #{gcn_forward.1} parent=0 // pred_check_branch
    %31 = sbr.rel (0) target = $region29
  $region28: #{gcn_forward.1} parent=0 // pred_region
    _
  $region29: #{gcn_forward.1} parent=0 // pred_fallthru
    _
  // Predicated region
  $region30: #{gcn_forward.1} parent=0 // pred_check
    _
  $region31: #{gcn_forward.1} parent=0 // pred_check_branch
    %33 = sbr.rel (0) target = $region33
  $region32: #{gcn_forward.1} parent=0 // pred_region
    _
  $region33: #{gcn_forward.1} parent=0 // pred_fallthru
    _
  // Predicated region
  $region34: #{gcn_forward.1} parent=0 // pred_check
    _
  $region35: #{gcn_forward.1} parent=0 // pred_check_branch
    %35 = sbr.rel (0) target = $region37
  $region36: #{gcn_forward.1} parent=0 // pred_region
    _
  $region37: #{gcn_forward.1} parent=0 // pred_fallthru
    _
  // Predicated region
  $region38: #{gcn_forward.1} parent=0 // pred_check
    _
  $region39: #{gcn_forward.1} parent=0 // pred_check_branch
    %37 = sbr.rel (0) target = $region41
  $region40: #{gcn_forward.1} parent=0 // pred_region
    _
  $region41: #{gcn_forward.1} parent=0 // pred_fallthru
    _
  // Predicated region
  $region42: #{gcn_forward.1} parent=0 // pred_check
    _
  $region43: #{gcn_forward.1} parent=0 // pred_check_branch
    %39 = sbr.rel (0) target = $region45
  $region44: #{gcn_forward.1} parent=0 // pred_region
    _
  $region45: #{gcn_forward.1} parent=0 // pred_fallthru
    _
  // Predicated region
  $region46: #{gcn_forward.1} parent=0 // pred_check
    _
  $region47: #{gcn_forward.1} parent=0 // pred_check_branch
    %41 = sbr.rel (0) target = $region49
  $region48: #{gcn_forward.1} parent=0 // pred_region
    _
  $region49: #{gcn_forward.1} parent=0 // pred_fallthru
    _
  // Predicated region
  $region50: #{gcn_forward.1} parent=0 // pred_check
    _
  $region51: #{gcn_forward.1} parent=0 // pred_check_branch
    %43 = sbr.rel (0) target = $region53
  $region52: #{gcn_forward.1} parent=0 // pred_region
    _
  $region53: #{gcn_forward.1} parent=0 // pred_fallthru
    _
  %v45 = vld [vmem:[%s1] sm:$0xf]
  %v46 = vld [vmem:[%s1 + $0x4] sm:$0xf]
  %v47 = vld [vmem:[%s0] sm:$0xff]
  %v48 = vld [vmem:[%s0 + $0x8] sm:$0xff]
  %v49 = vpack.c.bf16 %v48, %v47
  %v52 = vunpack.c.l.b16 %v45
  %v53 = vunpack.c.l.b16 %v46
  %v54 = vpack.c.b16 %v53, %v52
  %vm55 = vcmask 130048
  %v57 = vsel %vm55, %v54, 0
  %59 = vmatprep.subr.bf16.mxu0 0
  %60 = vmatpush1.bf16.msra.mxu0 0
  %61 = vmatprep.subr.bf16.mxu0 0
  %62 = vmatpush1.bf16.msra.mxu0 0
  %63 = vmatprep.subr.bf16.mxu0 0
  %64 = vmatpush1.bf16.msra.mxu0 0
  %65 = vmatprep.subr.bf16.mxu0 0
  %66 = vmatpush1.bf16.msra.mxu0 0
  %67 = vmatprep.subr.bf16.mxu0 0
  %68 = vmatpush1.bf16.msra.mxu0 0
  %69 = vmatprep.subr.bf16.mxu0 0
  %70 = vmatpush1.bf16.msra.mxu0 0
  %71 = vmatprep.subr.bf16.mxu0 0
  %72 = vmatpush1.bf16.msra.mxu0 0
  %73 = vmatprep.subr.bf16.mxu0 0
  %74 = vmatpush1.bf16.msra.mxu0 %v49
  %75 = vmatprep.subr.bf16.mxu0 0
  %76 = vmatpush2.bf16.msra.mxu0 0
  %77 = vmatprep.subr.bf16.mxu0 0
  %78 = vmatpush2.bf16.msra.mxu0 0
  %79 = vmatprep.subr.bf16.mxu0 0
  %80 = vmatpush2.bf16.msra.mxu0 0
  %81 = vmatprep.subr.bf16.mxu0 0
  %82 = vmatpush2.bf16.msra.mxu0 0
  %83 = vmatprep.subr.bf16.mxu0 0
  %84 = vmatpush2.bf16.msra.mxu0 0
  %85 = vmatprep.subr.bf16.mxu0 0
  %86 = vmatpush2.bf16.msra.mxu0 0
  %87 = vmatprep.subr.bf16.mxu0 0
  %88 = vmatpush2.bf16.msra.mxu0 0
  %89 = vmatprep.subr.bf16.mxu0 0
  %90 = vmatpush2.bf16.msra.mxu0 0
  %91 = vmatprep.mubr.bf16.mxu0 0
  %92 = vmatmul.mubr.bf16.gmra.mxu0 %v57
  %v93 = vpop.f32.mrf.mxu0
  %v94 = vadd.f32 0.0, %v93
  %v95 = vpop.f32.mrf.mxu0
  %v96 = vpop.f32.mrf.mxu0
  %v97 = vadd.f32 0.0, %v96
  %v98 = vpop.f32.mrf.mxu0
  %99 = vdwg.mxu0
  %v101 = vunpack.c.l.b16 %v49
  %v102 = vunpack.c.h.b16 %v49
  %v103 = vpack.c.b16 %v101, %v101
  %v104 = vpack.c.b16 %v102, %v102
  %107 = vst [vmem:[#allocation2] sm:$0xf] %v103
  %108 = vst [vmem:[#allocation2 + $0x8] sm:$0xf] %v104
  %v109 = vpack.c.bf16 %v97, %v94
  %v111 = vunpack.c.l.b16 %v109
  %v112 = vunpack.c.h.b16 %v109
  %v113 = vpack.c.b16 %v111, %v111
  %v114 = vpack.c.b16 %v112, %v112
  %117 = vst [vmem:[#allocation2 + $0x4] sm:$0xf] %v113
  %118 = vst [vmem:[#allocation2 + $0xc] sm:$0xf] %v114
  %v119 = vld [vmem:[#allocation2] sm:$0xff]
  %v120 = vld [vmem:[#allocation2 + $0x8] sm:$0xff]
  %v121 = vld [vmem:[%s2] sm:$0xf]
  %v122 = vld [vmem:[%s2 + $0x4] sm:$0xf]
  %v123 = vld [vmem:[%s2 + $0x8] sm:$0xf]
  %v124 = vld [vmem:[%s2 + $0xc] sm:$0xf]
  %v125 = vld [vmem:[%s2 + $0x10] sm:$0xf]
  %v126 = vld [vmem:[%s2 + $0x14] sm:$0xf]
  %v127 = vld [vmem:[%s2 + $0x18] sm:$0xf]
  %v128 = vld [vmem:[%s2 + $0x1c] sm:$0xf]
  %v129 = vld [vmem:[%s2 + $0x20] sm:$0xf]
  %v130 = vld [vmem:[%s2 + $0x24] sm:$0xf]
  %v131 = vld [vmem:[%s2 + $0x28] sm:$0xf]
  %v132 = vld [vmem:[%s2 + $0x2c] sm:$0xf]
  %v133 = vld [vmem:[%s2 + $0x30] sm:$0xf]
  %v134 = vld [vmem:[%s2 + $0x34] sm:$0xf]
  %v135 = vld [vmem:[%s2 + $0x38] sm:$0xf]
  %v136 = vld [vmem:[%s2 + $0x3c] sm:$0xf]
  %v137 = vld [vmem:[%s2 + $0x40] sm:$0xf]
  %v138 = vld [vmem:[%s2 + $0x44] sm:$0xf]
  %v139 = vld [vmem:[%s2 + $0x48] sm:$0xf]
  %v140 = vld [vmem:[%s2 + $0x4c] sm:$0xf]
  %v141 = vld [vmem:[%s2 + $0x50] sm:$0xf]
  %v142 = vld [vmem:[%s2 + $0x54] sm:$0xf]
  %v143 = vld [vmem:[%s2 + $0x58] sm:$0xf]
  %v144 = vld [vmem:[%s2 + $0x5c] sm:$0xf]
  %v145 = vld [vmem:[%s2 + $0x60] sm:$0xf]
  %v146 = vld [vmem:[%s2 + $0x64] sm:$0xf]
  %v147 = vld [vmem:[%s2 + $0x68] sm:$0xf]
  %v148 = vld [vmem:[%s2 + $0x6c] sm:$0xf]
  %v149 = vld [vmem:[%s2 + $0x70] sm:$0xf]
  %v150 = vld [vmem:[%s2 + $0x74] sm:$0xf]
  %v151 = vld [vmem:[%s2 + $0x78] sm:$0xf]
  %v152 = vld [vmem:[%s2 + $0x7c] sm:$0xf]
  %v153 = vld [vmem:[%s3] sm:$0x1]
  %v155 = vlaneseq
  %v156 = vshrl.u32 %v155, 7
  %v157 = vsub.s32 0, %v156
  %v158 = vrot.slane %v153, %v157
  %v162 = vunpack.c.l.b16 %v119
  %v163 = vunpack.c.h.b16 %v119
  %v164 = vunpack.c.l.b16 %v120
  %v165 = vunpack.c.h.b16 %v120
  %v166 = vpack.c.b16 %v164, %v162
  %v167 = vpack.c.b16 %v165, %v163
  %v202 = vunpack.c.l.b16 %v121
  %v203 = vunpack.c.l.b16 %v122
  %v204 = vunpack.c.l.b16 %v123
  %v205 = vunpack.c.l.b16 %v124
  %v206 = vunpack.c.l.b16 %v125
  %v207 = vunpack.c.l.b16 %v126
  %v208 = vunpack.c.l.b16 %v127
  %v209 = vunpack.c.l.b16 %v128
  %v210 = vunpack.c.l.b16 %v129
  %v211 = vunpack.c.l.b16 %v130
  %v212 = vunpack.c.l.b16 %v131
  %v213 = vunpack.c.l.b16 %v132
  %v214 = vunpack.c.l.b16 %v133
  %v215 = vunpack.c.l.b16 %v134
  %v216 = vunpack.c.l.b16 %v135
  %v217 = vunpack.c.l.b16 %v136
  %v218 = vunpack.c.l.b16 %v137
  %v219 = vunpack.c.l.b16 %v138
  %v220 = vunpack.c.l.b16 %v139
  %v221 = vunpack.c.l.b16 %v140
  %v222 = vunpack.c.l.b16 %v141
  %v223 = vunpack.c.l.b16 %v142
  %v224 = vunpack.c.l.b16 %v143
  %v225 = vunpack.c.l.b16 %v144
  %v226 = vunpack.c.l.b16 %v145
  %v227 = vunpack.c.l.b16 %v146
  %v228 = vunpack.c.l.b16 %v147
  %v229 = vunpack.c.l.b16 %v148
  %v230 = vunpack.c.l.b16 %v149
  %v231 = vunpack.c.l.b16 %v150
  %v232 = vunpack.c.l.b16 %v151
  %v233 = vunpack.c.l.b16 %v152
  %v234 = vpack.c.b16 %v203, %v202
  %v235 = vpack.c.b16 %v205, %v204
  %v236 = vpack.c.b16 %v207, %v206
  %v237 = vpack.c.b16 %v209, %v208
  %v238 = vpack.c.b16 %v211, %v210
  %v239 = vpack.c.b16 %v213, %v212
  %v240 = vpack.c.b16 %v215, %v214
  %v241 = vpack.c.b16 %v217, %v216
  %v242 = vpack.c.b16 %v219, %v218
  %v243 = vpack.c.b16 %v221, %v220
  %v244 = vpack.c.b16 %v223, %v222
  %v245 = vpack.c.b16 %v225, %v224
  %v246 = vpack.c.b16 %v227, %v226
  %v247 = vpack.c.b16 %v229, %v228
  %v248 = vpack.c.b16 %v231, %v230
  %v249 = vpack.c.b16 %v233, %v232
  %266 = vmatprep.subr.bf16.mxu0 0
  %267 = vmatpush1.bf16.msra.mxu0 %v241
  %268 = vmatprep.subr.bf16.mxu0 0
  %269 = vmatpush1.bf16.msra.mxu0 %v240
  %270 = vmatprep.subr.bf16.mxu0 0
  %271 = vmatpush1.bf16.msra.mxu0 %v239
  %272 = vmatprep.subr.bf16.mxu0 0
  %273 = vmatpush1.bf16.msra.mxu0 %v238
  %274 = vmatprep.subr.bf16.mxu0 0
  %275 = vmatpush1.bf16.msra.mxu0 %v237
  %276 = vmatprep.subr.bf16.mxu0 0
  %277 = vmatpush1.bf16.msra.mxu0 %v236
  %278 = vmatprep.subr.bf16.mxu0 0
  %279 = vmatpush1.bf16.msra.mxu0 %v235
  %280 = vmatprep.subr.bf16.mxu0 0
  %281 = vmatpush1.bf16.msra.mxu0 %v234
  %282 = vmatprep.subr.bf16.mxu0 0
  %283 = vmatpush2.bf16.msra.mxu0 %v249
  %284 = vmatprep.subr.bf16.mxu0 0
  %285 = vmatpush2.bf16.msra.mxu0 %v248
  %286 = vmatprep.subr.bf16.mxu0 0
  %287 = vmatpush2.bf16.msra.mxu0 %v247
  %288 = vmatprep.subr.bf16.mxu0 0
  %289 = vmatpush2.bf16.msra.mxu0 %v246
  %290 = vmatprep.subr.bf16.mxu0 0
  %291 = vmatpush2.bf16.msra.mxu0 %v245
  %292 = vmatprep.subr.bf16.mxu0 0
  %293 = vmatpush2.bf16.msra.mxu0 %v244
  %294 = vmatprep.subr.bf16.mxu0 0
  %295 = vmatpush2.bf16.msra.mxu0 %v243
  %296 = vmatprep.subr.bf16.mxu0 0
  %297 = vmatpush2.bf16.msra.mxu0 %v242
  %298 = vmatprep.mubr.bf16.mxu0 %v167
  %299 = vmatmul.mubr.bf16.gmra.mxu0 %v166
  %v300 = vpop.f32.mrf.mxu0
  %v301 = vadd.f32 %v158, %v300
  %v302 = vpop.f32.mrf.mxu0
  %v303 = vpop.f32.mrf.mxu0
  %v304 = vadd.f32 %v158, %v303
  %v305 = vpop.f32.mrf.mxu0
  %306 = vdwg.mxu0
  %vm307 = vcmp.ge.f32.partialorder %v301, 0.0
  %vm308 = vcmp.ge.f32.partialorder %v304, 0.0
  %v309 = vmul.f32 %v301, 0.01
  %v310 = vmul.f32 %v304, 0.01
  %v311 = vsel %vm307, %v301, %v309
  %v312 = vsel %vm308, %v304, %v310
  %v313 = vpack.c.bf16 %v312, %v311
  %314 = vmatprep.subr.bf16.mxu0 0
  %315 = vmatpush1.bf16.msra.mxu0 0
  %316 = vmatprep.subr.bf16.mxu0 0
  %317 = vmatpush1.bf16.msra.mxu0 0
  %318 = vmatprep.subr.bf16.mxu0 0
  %319 = vmatpush1.bf16.msra.mxu0 0
  %320 = vmatprep.subr.bf16.mxu0 0
  %321 = vmatpush1.bf16.msra.mxu0 0
  %322 = vmatprep.subr.bf16.mxu0 0
  %323 = vmatpush1.bf16.msra.mxu0 0
  %324 = vmatprep.subr.bf16.mxu0 0
  %325 = vmatpush1.bf16.msra.mxu0 0
  %326 = vmatprep.subr.bf16.mxu0 0
  %327 = vmatpush1.bf16.msra.mxu0 0
  %328 = vmatprep.subr.bf16.mxu0 0
  %329 = vmatpush1.bf16.msra.mxu0 %v313
  %330 = vmatprep.subr.bf16.mxu0 0
  %331 = vmatpush2.bf16.msra.mxu0 0
  %332 = vmatprep.subr.bf16.mxu0 0
  %333 = vmatpush2.bf16.msra.mxu0 0
  %334 = vmatprep.subr.bf16.mxu0 0
  %335 = vmatpush2.bf16.msra.mxu0 0
  %336 = vmatprep.subr.bf16.mxu0 0
  %337 = vmatpush2.bf16.msra.mxu0 0
  %338 = vmatprep.subr.bf16.mxu0 0
  %339 = vmatpush2.bf16.msra.mxu0 0
  %340 = vmatprep.subr.bf16.mxu0 0
  %341 = vmatpush2.bf16.msra.mxu0 0
  %342 = vmatprep.subr.bf16.mxu0 0
  %343 = vmatpush2.bf16.msra.mxu0 0
  %344 = vmatprep.subr.bf16.mxu0 0
  %345 = vmatpush2.bf16.msra.mxu0 0
  %346 = vmatprep.mubr.bf16.mxu0 0
  %347 = vmatmul.mubr.bf16.gmra.mxu0 %v57
  %v348 = vpop.f32.mrf.mxu0
  %v349 = vadd.f32 0.0, %v348
  %v350 = vpop.f32.mrf.mxu0
  %v351 = vpop.f32.mrf.mxu0
  %v352 = vadd.f32 0.0, %v351
  %v353 = vpop.f32.mrf.mxu0
  %354 = vdwg.mxu0
  %v356 = vunpack.c.l.b16 %v313
  %v357 = vunpack.c.h.b16 %v313
  %v358 = vpack.c.b16 %v356, %v356
  %v359 = vpack.c.b16 %v357, %v357
  %362 = vst [vmem:[#allocation2] sm:$0xf] %v358
  %363 = vst [vmem:[#allocation2 + $0x8] sm:$0xf] %v359
  %v364 = vpack.c.bf16 %v352, %v349
  %v366 = vunpack.c.l.b16 %v364
  %v367 = vunpack.c.h.b16 %v364
  %v368 = vpack.c.b16 %v366, %v366
  %v369 = vpack.c.b16 %v367, %v367
  %372 = vst [vmem:[#allocation2 + $0x4] sm:$0xf] %v368
  %373 = vst [vmem:[#allocation2 + $0xc] sm:$0xf] %v369
  %v374 = vld [vmem:[#allocation2] sm:$0xff]
  %v375 = vld [vmem:[#allocation2 + $0x8] sm:$0xff]
  %s376 = scalar_lea.vmem %s2, 128
  %v377 = vld [vmem:[%s376] sm:$0xf]
  %v378 = vld [vmem:[%s376 + $0x4] sm:$0xf]
  %v379 = vld [vmem:[%s376 + $0x8] sm:$0xf]
  %v380 = vld [vmem:[%s376 + $0xc] sm:$0xf]
  %v381 = vld [vmem:[%s376 + $0x10] sm:$0xf]
  %v382 = vld [vmem:[%s376 + $0x14] sm:$0xf]
  %v383 = vld [vmem:[%s376 + $0x18] sm:$0xf]
  %v384 = vld [vmem:[%s376 + $0x1c] sm:$0xf]
  %v385 = vld [vmem:[%s376 + $0x20] sm:$0xf]
  %v386 = vld [vmem:[%s376 + $0x24] sm:$0xf]
  %v387 = vld [vmem:[%s376 + $0x28] sm:$0xf]
  %v388 = vld [vmem:[%s376 + $0x2c] sm:$0xf]
  %v389 = vld [vmem:[%s376 + $0x30] sm:$0xf]
  %v390 = vld [vmem:[%s376 + $0x34] sm:$0xf]
  %v391 = vld [vmem:[%s376 + $0x38] sm:$0xf]
  %v392 = vld [vmem:[%s376 + $0x3c] sm:$0xf]
  %v393 = vld [vmem:[%s376 + $0x40] sm:$0xf]
  %v394 = vld [vmem:[%s376 + $0x44] sm:$0xf]
  %v395 = vld [vmem:[%s376 + $0x48] sm:$0xf]
  %v396 = vld [vmem:[%s376 + $0x4c] sm:$0xf]
  %v397 = vld [vmem:[%s376 + $0x50] sm:$0xf]
  %v398 = vld [vmem:[%s376 + $0x54] sm:$0xf]
  %v399 = vld [vmem:[%s376 + $0x58] sm:$0xf]
  %v400 = vld [vmem:[%s376 + $0x5c] sm:$0xf]
  %v401 = vld [vmem:[%s376 + $0x60] sm:$0xf]
  %v402 = vld [vmem:[%s376 + $0x64] sm:$0xf]
  %v403 = vld [vmem:[%s376 + $0x68] sm:$0xf]
  %v404 = vld [vmem:[%s376 + $0x6c] sm:$0xf]
  %v405 = vld [vmem:[%s376 + $0x70] sm:$0xf]
  %v406 = vld [vmem:[%s376 + $0x74] sm:$0xf]
  %v407 = vld [vmem:[%s376 + $0x78] sm:$0xf]
  %v408 = vld [vmem:[%s376 + $0x7c] sm:$0xf]
  %s409 = scalar_lea.vmem %s3, 1
  %v410 = vld [vmem:[%s409] sm:$0x1]
  %v412 = vlaneseq
  %v413 = vshrl.u32 %v412, 7
  %v414 = vsub.s32 0, %v413
  %v415 = vrot.slane %v410, %v414
  %v419 = vunpack.c.l.b16 %v374
  %v420 = vunpack.c.h.b16 %v374
  %v421 = vunpack.c.l.b16 %v375
  %v422 = vunpack.c.h.b16 %v375
  %v423 = vpack.c.b16 %v421, %v419
  %v424 = vpack.c.b16 %v422, %v420
  %v459 = vunpack.c.l.b16 %v377
  %v460 = vunpack.c.l.b16 %v378
  %v461 = vunpack.c.l.b16 %v379
  %v462 = vunpack.c.l.b16 %v380
  %v463 = vunpack.c.l.b16 %v381
  %v464 = vunpack.c.l.b16 %v382
  %v465 = vunpack.c.l.b16 %v383
  %v466 = vunpack.c.l.b16 %v384
  %v467 = vunpack.c.l.b16 %v385
  %v468 = vunpack.c.l.b16 %v386
  %v469 = vunpack.c.l.b16 %v387
  %v470 = vunpack.c.l.b16 %v388
  %v471 = vunpack.c.l.b16 %v389
  %v472 = vunpack.c.l.b16 %v390
  %v473 = vunpack.c.l.b16 %v391
  %v474 = vunpack.c.l.b16 %v392
  %v475 = vunpack.c.l.b16 %v393
  %v476 = vunpack.c.l.b16 %v394
  %v477 = vunpack.c.l.b16 %v395
  %v478 = vunpack.c.l.b16 %v396
  %v479 = vunpack.c.l.b16 %v397
  %v480 = vunpack.c.l.b16 %v398
  %v481 = vunpack.c.l.b16 %v399
  %v482 = vunpack.c.l.b16 %v400
  %v483 = vunpack.c.l.b16 %v401
  %v484 = vunpack.c.l.b16 %v402
  %v485 = vunpack.c.l.b16 %v403
  %v486 = vunpack.c.l.b16 %v404
  %v487 = vunpack.c.l.b16 %v405
  %v488 = vunpack.c.l.b16 %v406
  %v489 = vunpack.c.l.b16 %v407
  %v490 = vunpack.c.l.b16 %v408
  %v491 = vpack.c.b16 %v460, %v459
  %v492 = vpack.c.b16 %v462, %v461
  %v493 = vpack.c.b16 %v464, %v463
  %v494 = vpack.c.b16 %v466, %v465
  %v495 = vpack.c.b16 %v468, %v467
  %v496 = vpack.c.b16 %v470, %v469
  %v497 = vpack.c.b16 %v472, %v471
  %v498 = vpack.c.b16 %v474, %v473
  %v499 = vpack.c.b16 %v476, %v475
  %v500 = vpack.c.b16 %v478, %v477
  %v501 = vpack.c.b16 %v480, %v479
  %v502 = vpack.c.b16 %v482, %v481
  %v503 = vpack.c.b16 %v484, %v483
  %v504 = vpack.c.b16 %v486, %v485
  %v505 = vpack.c.b16 %v488, %v487
  %v506 = vpack.c.b16 %v490, %v489
  %523 = vmatprep.subr.bf16.mxu0 0
  %524 = vmatpush1.bf16.msra.mxu0 %v498
  %525 = vmatprep.subr.bf16.mxu0 0
  %526 = vmatpush1.bf16.msra.mxu0 %v497
  %527 = vmatprep.subr.bf16.mxu0 0
  %528 = vmatpush1.bf16.msra.mxu0 %v496
  %529 = vmatprep.subr.bf16.mxu0 0
  %530 = vmatpush1.bf16.msra.mxu0 %v495
  %531 = vmatprep.subr.bf16.mxu0 0
  %532 = vmatpush1.bf16.msra.mxu0 %v494
  %533 = vmatprep.subr.bf16.mxu0 0
  %534 = vmatpush1.bf16.msra.mxu0 %v493
  %535 = vmatprep.subr.bf16.mxu0 0
  %536 = vmatpush1.bf16.msra.mxu0 %v492
  %537 = vmatprep.subr.bf16.mxu0 0
  %538 = vmatpush1.bf16.msra.mxu0 %v491
  %539 = vmatprep.subr.bf16.mxu0 0
  %540 = vmatpush2.bf16.msra.mxu0 %v506
  %541 = vmatprep.subr.bf16.mxu0 0
  %542 = vmatpush2.bf16.msra.mxu0 %v505
  %543 = vmatprep.subr.bf16.mxu0 0
  %544 = vmatpush2.bf16.msra.mxu0 %v504
  %545 = vmatprep.subr.bf16.mxu0 0
  %546 = vmatpush2.bf16.msra.mxu0 %v503
  %547 = vmatprep.subr.bf16.mxu0 0
  %548 = vmatpush2.bf16.msra.mxu0 %v502
  %549 = vmatprep.subr.bf16.mxu0 0
  %550 = vmatpush2.bf16.msra.mxu0 %v501
  %551 = vmatprep.subr.bf16.mxu0 0
  %552 = vmatpush2.bf16.msra.mxu0 %v500
  %553 = vmatprep.subr.bf16.mxu0 0
  %554 = vmatpush2.bf16.msra.mxu0 %v499
  %555 = vmatprep.mubr.bf16.mxu0 %v424
  %556 = vmatmul.mubr.bf16.gmra.mxu0 %v423
  %v557 = vpop.f32.mrf.mxu0
  %v558 = vadd.f32 %v415, %v557
  %v559 = vpop.f32.mrf.mxu0
  %v560 = vpop.f32.mrf.mxu0
  %v561 = vadd.f32 %v415, %v560
  %v562 = vpop.f32.mrf.mxu0
  %563 = vdwg.mxu0
  %vm564 = vcmp.ge.f32.partialorder %v558, 0.0
  %vm565 = vcmp.ge.f32.partialorder %v561, 0.0
  %v566 = vmul.f32 %v558, 0.01
  %v567 = vmul.f32 %v561, 0.01
  %v568 = vsel %vm564, %v558, %v566
  %v569 = vsel %vm565, %v561, %v567
  %v570 = vadd.f32 %v568, %v311
  %v571 = vadd.f32 %v569, %v312
  %v572 = vpack.c.bf16 %v571, %v570
  %573 = vmatprep.subr.bf16.mxu0 0
  %574 = vmatpush1.bf16.msra.mxu0 0
  %575 = vmatprep.subr.bf16.mxu0 0
  %576 = vmatpush1.bf16.msra.mxu0 0
  %577 = vmatprep.subr.bf16.mxu0 0
  %578 = vmatpush1.bf16.msra.mxu0 0
  %579 = vmatprep.subr.bf16.mxu0 0
  %580 = vmatpush1.bf16.msra.mxu0 0
  %581 = vmatprep.subr.bf16.mxu0 0
  %582 = vmatpush1.bf16.msra.mxu0 0
  %583 = vmatprep.subr.bf16.mxu0 0
  %584 = vmatpush1.bf16.msra.mxu0 0
  %585 = vmatprep.subr.bf16.mxu0 0
  %586 = vmatpush1.bf16.msra.mxu0 0
  %587 = vmatprep.subr.bf16.mxu0 0
  %588 = vmatpush1.bf16.msra.mxu0 %v572
  %589 = vmatprep.subr.bf16.mxu0 0
  %590 = vmatpush2.bf16.msra.mxu0 0
  %591 = vmatprep.subr.bf16.mxu0 0
  %592 = vmatpush2.bf16.msra.mxu0 0
  %593 = vmatprep.subr.bf16.mxu0 0
  %594 = vmatpush2.bf16.msra.mxu0 0
  %595 = vmatprep.subr.bf16.mxu0 0
  %596 = vmatpush2.bf16.msra.mxu0 0
  %597 = vmatprep.subr.bf16.mxu0 0
  %598 = vmatpush2.bf16.msra.mxu0 0
  %599 = vmatprep.subr.bf16.mxu0 0
  %600 = vmatpush2.bf16.msra.mxu0 0
  %601 = vmatprep.subr.bf16.mxu0 0
  %602 = vmatpush2.bf16.msra.mxu0 0
  %603 = vmatprep.subr.bf16.mxu0 0
  %604 = vmatpush2.bf16.msra.mxu0 0
  %605 = vmatprep.mubr.bf16.mxu0 0
  %606 = vmatmul.mubr.bf16.gmra.mxu0 %v57
  %v607 = vpop.f32.mrf.mxu0
  %v608 = vadd.f32 0.0, %v607
  %v609 = vpop.f32.mrf.mxu0
  %v610 = vpop.f32.mrf.mxu0
  %v611 = vadd.f32 0.0, %v610
  %v612 = vpop.f32.mrf.mxu0
  %613 = vdwg.mxu0
  %v615 = vunpack.c.l.b16 %v572
  %v616 = vunpack.c.h.b16 %v572
  %v617 = vpack.c.b16 %v615, %v615
  %v618 = vpack.c.b16 %v616, %v616
  %621 = vst [vmem:[#allocation2] sm:$0xf] %v617
  %622 = vst [vmem:[#allocation2 + $0x8] sm:$0xf] %v618
  %v623 = vpack.c.bf16 %v611, %v608
  %v625 = vunpack.c.l.b16 %v623
  %v626 = vunpack.c.h.b16 %v623
  %v627 = vpack.c.b16 %v625, %v625
  %v628 = vpack.c.b16 %v626, %v626
  %631 = vst [vmem:[#allocation2 + $0x4] sm:$0xf] %v627
  %632 = vst [vmem:[#allocation2 + $0xc] sm:$0xf] %v628
  %v633 = vld [vmem:[#allocation2] sm:$0xff]
  %v634 = vld [vmem:[#allocation2 + $0x8] sm:$0xff]
  %s635 = scalar_lea.vmem %s2, 256
  %v636 = vld [vmem:[%s635] sm:$0xf]
  %v637 = vld [vmem:[%s635 + $0x4] sm:$0xf]
  %v638 = vld [vmem:[%s635 + $0x8] sm:$0xf]
  %v639 = vld [vmem:[%s635 + $0xc] sm:$0xf]
  %v640 = vld [vmem:[%s635 + $0x10] sm:$0xf]
  %v641 = vld [vmem:[%s635 + $0x14] sm:$0xf]
  %v642 = vld [vmem:[%s635 + $0x18] sm:$0xf]
  %v643 = vld [vmem:[%s635 + $0x1c] sm:$0xf]
  %v644 = vld [vmem:[%s635 + $0x20] sm:$0xf]
  %v645 = vld [vmem:[%s635 + $0x24] sm:$0xf]
  %v646 = vld [vmem:[%s635 + $0x28] sm:$0xf]
  %v647 = vld [vmem:[%s635 + $0x2c] sm:$0xf]
  %v648 = vld [vmem:[%s635 + $0x30] sm:$0xf]
  %v649 = vld [vmem:[%s635 + $0x34] sm:$0xf]
  %v650 = vld [vmem:[%s635 + $0x38] sm:$0xf]
  %v651 = vld [vmem:[%s635 + $0x3c] sm:$0xf]
  %v652 = vld [vmem:[%s635 + $0x40] sm:$0xf]
  %v653 = vld [vmem:[%s635 + $0x44] sm:$0xf]
  %v654 = vld [vmem:[%s635 + $0x48] sm:$0xf]
  %v655 = vld [vmem:[%s635 + $0x4c] sm:$0xf]
  %v656 = vld [vmem:[%s635 + $0x50] sm:$0xf]
  %v657 = vld [vmem:[%s635 + $0x54] sm:$0xf]
  %v658 = vld [vmem:[%s635 + $0x58] sm:$0xf]
  %v659 = vld [vmem:[%s635 + $0x5c] sm:$0xf]
  %v660 = vld [vmem:[%s635 + $0x60] sm:$0xf]
  %v661 = vld [vmem:[%s635 + $0x64] sm:$0xf]
  %v662 = vld [vmem:[%s635 + $0x68] sm:$0xf]
  %v663 = vld [vmem:[%s635 + $0x6c] sm:$0xf]
  %v664 = vld [vmem:[%s635 + $0x70] sm:$0xf]
  %v665 = vld [vmem:[%s635 + $0x74] sm:$0xf]
  %v666 = vld [vmem:[%s635 + $0x78] sm:$0xf]
  %v667 = vld [vmem:[%s635 + $0x7c] sm:$0xf]
  %s668 = scalar_lea.vmem %s3, 2
  %v669 = vld [vmem:[%s668] sm:$0x1]
  %v671 = vlaneseq
  %v672 = vshrl.u32 %v671, 7
  %v673 = vsub.s32 0, %v672
  %v674 = vrot.slane %v669, %v673
  %v678 = vunpack.c.l.b16 %v633
  %v679 = vunpack.c.h.b16 %v633
  %v680 = vunpack.c.l.b16 %v634
  %v681 = vunpack.c.h.b16 %v634
  %v682 = vpack.c.b16 %v680, %v678
  %v683 = vpack.c.b16 %v681, %v679
  %v718 = vunpack.c.l.b16 %v636
  %v719 = vunpack.c.l.b16 %v637
  %v720 = vunpack.c.l.b16 %v638
  %v721 = vunpack.c.l.b16 %v639
  %v722 = vunpack.c.l.b16 %v640
  %v723 = vunpack.c.l.b16 %v641
  %v724 = vunpack.c.l.b16 %v642
  %v725 = vunpack.c.l.b16 %v643
  %v726 = vunpack.c.l.b16 %v644
  %v727 = vunpack.c.l.b16 %v645
  %v728 = vunpack.c.l.b16 %v646
  %v729 = vunpack.c.l.b16 %v647
  %v730 = vunpack.c.l.b16 %v648
  %v731 = vunpack.c.l.b16 %v649
  %v732 = vunpack.c.l.b16 %v650
  %v733 = vunpack.c.l.b16 %v651
  %v734 = vunpack.c.l.b16 %v652
  %v735 = vunpack.c.l.b16 %v653
  %v736 = vunpack.c.l.b16 %v654
  %v737 = vunpack.c.l.b16 %v655
  %v738 = vunpack.c.l.b16 %v656
  %v739 = vunpack.c.l.b16 %v657
  %v740 = vunpack.c.l.b16 %v658
  %v741 = vunpack.c.l.b16 %v659
  %v742 = vunpack.c.l.b16 %v660
  %v743 = vunpack.c.l.b16 %v661
  %v744 = vunpack.c.l.b16 %v662
  %v745 = vunpack.c.l.b16 %v663
  %v746 = vunpack.c.l.b16 %v664
  %v747 = vunpack.c.l.b16 %v665
  %v748 = vunpack.c.l.b16 %v666
  %v749 = vunpack.c.l.b16 %v667
  %v750 = vpack.c.b16 %v719, %v718
  %v751 = vpack.c.b16 %v721, %v720
  %v752 = vpack.c.b16 %v723, %v722
  %v753 = vpack.c.b16 %v725, %v724
  %v754 = vpack.c.b16 %v727, %v726
  %v755 = vpack.c.b16 %v729, %v728
  %v756 = vpack.c.b16 %v731, %v730
  %v757 = vpack.c.b16 %v733, %v732
  %v758 = vpack.c.b16 %v735, %v734
  %v759 = vpack.c.b16 %v737, %v736
  %v760 = vpack.c.b16 %v739, %v738
  %v761 = vpack.c.b16 %v741, %v740
  %v762 = vpack.c.b16 %v743, %v742
  %v763 = vpack.c.b16 %v745, %v744
  %v764 = vpack.c.b16 %v747, %v746
  %v765 = vpack.c.b16 %v749, %v748
  %782 = vmatprep.subr.bf16.mxu0 0
  %783 = vmatpush1.bf16.msra.mxu0 %v757
  %784 = vmatprep.subr.bf16.mxu0 0
  %785 = vmatpush1.bf16.msra.mxu0 %v756
  %786 = vmatprep.subr.bf16.mxu0 0
  %787 = vmatpush1.bf16.msra.mxu0 %v755
  %788 = vmatprep.subr.bf16.mxu0 0
  %789 = vmatpush1.bf16.msra.mxu0 %v754
  %790 = vmatprep.subr.bf16.mxu0 0
  %791 = vmatpush1.bf16.msra.mxu0 %v753
  %792 = vmatprep.subr.bf16.mxu0 0
  %793 = vmatpush1.bf16.msra.mxu0 %v752
  %794 = vmatprep.subr.bf16.mxu0 0
  %795 = vmatpush1.bf16.msra.mxu0 %v751
  %796 = vmatprep.subr.bf16.mxu0 0
  %797 = vmatpush1.bf16.msra.mxu0 %v750
  %798 = vmatprep.subr.bf16.mxu0 0
  %799 = vmatpush2.bf16.msra.mxu0 %v765
  %800 = vmatprep.subr.bf16.mxu0 0
  %801 = vmatpush2.bf16.msra.mxu0 %v764
  %802 = vmatprep.subr.bf16.mxu0 0
  %803 = vmatpush2.bf16.msra.mxu0 %v763
  %804 = vmatprep.subr.bf16.mxu0 0
  %805 = vmatpush2.bf16.msra.mxu0 %v762
  %806 = vmatprep.subr.bf16.mxu0 0
  %807 = vmatpush2.bf16.msra.mxu0 %v761
  %808 = vmatprep.subr.bf16.mxu0 0
  %809 = vmatpush2.bf16.msra.mxu0 %v760
  %810 = vmatprep.subr.bf16.mxu0 0
  %811 = vmatpush2.bf16.msra.mxu0 %v759
  %812 = vmatprep.subr.bf16.mxu0 0
  %813 = vmatpush2.bf16.msra.mxu0 %v758
  %814 = vmatprep.mubr.bf16.mxu0 %v683
  %815 = vmatmul.mubr.bf16.gmra.mxu0 %v682
  %v816 = vpop.f32.mrf.mxu0
  %v817 = vadd.f32 %v674, %v816
  %v818 = vpop.f32.mrf.mxu0
  %v819 = vpop.f32.mrf.mxu0
  %v820 = vadd.f32 %v674, %v819
  %v821 = vpop.f32.mrf.mxu0
  %822 = vdwg.mxu0
  %vm823 = vcmp.ge.f32.partialorder %v817, 0.0
  %vm824 = vcmp.ge.f32.partialorder %v820, 0.0
  %v825 = vmul.f32 %v817, 0.01
  %v826 = vmul.f32 %v820, 0.01
  %v827 = vsel %vm823, %v817, %v825
  %v828 = vsel %vm824, %v820, %v826
  %v829 = vadd.f32 %v827, %v570
  %v830 = vadd.f32 %v828, %v571
  %v831 = vpack.c.bf16 %v830, %v829
  %832 = vmatprep.subr.bf16.mxu0 0
  %833 = vmatpush1.bf16.msra.mxu0 0
  %834 = vmatprep.subr.bf16.mxu0 0
  %835 = vmatpush1.bf16.msra.mxu0 0
  %836 = vmatprep.subr.bf16.mxu0 0
  %837 = vmatpush1.bf16.msra.mxu0 0
  %838 = vmatprep.subr.bf16.mxu0 0
  %839 = vmatpush1.bf16.msra.mxu0 0
  %840 = vmatprep.subr.bf16.mxu0 0
  %841 = vmatpush1.bf16.msra.mxu0 0
  %842 = vmatprep.subr.bf16.mxu0 0
  %843 = vmatpush1.bf16.msra.mxu0 0
  %844 = vmatprep.subr.bf16.mxu0 0
  %845 = vmatpush1.bf16.msra.mxu0 0
  %846 = vmatprep.subr.bf16.mxu0 0
  %847 = vmatpush1.bf16.msra.mxu0 %v831
  %848 = vmatprep.subr.bf16.mxu0 0
  %849 = vmatpush2.bf16.msra.mxu0 0
  %850 = vmatprep.subr.bf16.mxu0 0
  %851 = vmatpush2.bf16.msra.mxu0 0
  %852 = vmatprep.subr.bf16.mxu0 0
  %853 = vmatpush2.bf16.msra.mxu0 0
  %854 = vmatprep.subr.bf16.mxu0 0
  %855 = vmatpush2.bf16.msra.mxu0 0
  %856 = vmatprep.subr.bf16.mxu0 0
  %857 = vmatpush2.bf16.msra.mxu0 0
  %858 = vmatprep.subr.bf16.mxu0 0
  %859 = vmatpush2.bf16.msra.mxu0 0
  %860 = vmatprep.subr.bf16.mxu0 0
  %861 = vmatpush2.bf16.msra.mxu0 0
  %862 = vmatprep.subr.bf16.mxu0 0
  %863 = vmatpush2.bf16.msra.mxu0 0
  %864 = vmatprep.mubr.bf16.mxu0 0
  %865 = vmatmul.mubr.bf16.gmra.mxu0 %v57
  %v866 = vpop.f32.mrf.mxu0
  %v867 = vadd.f32 0.0, %v866
  %v868 = vpop.f32.mrf.mxu0
  %v869 = vpop.f32.mrf.mxu0
  %v870 = vadd.f32 0.0, %v869
  %v871 = vpop.f32.mrf.mxu0
  %872 = vdwg.mxu0
  %v874 = vunpack.c.l.b16 %v831
  %v875 = vunpack.c.h.b16 %v831
  %v876 = vpack.c.b16 %v874, %v874
  %v877 = vpack.c.b16 %v875, %v875
  %880 = vst [vmem:[#allocation2] sm:$0xf] %v876
  %881 = vst [vmem:[#allocation2 + $0x8] sm:$0xf] %v877
  %v882 = vpack.c.bf16 %v870, %v867
  %v884 = vunpack.c.l.b16 %v882
  %v885 = vunpack.c.h.b16 %v882
  %v886 = vpack.c.b16 %v884, %v884
  %v887 = vpack.c.b16 %v885, %v885
  %890 = vst [vmem:[#allocation2 + $0x4] sm:$0xf] %v886
  %891 = vst [vmem:[#allocation2 + $0xc] sm:$0xf] %v887
  %v892 = vld [vmem:[#allocation2] sm:$0xff]
  %v893 = vld [vmem:[#allocation2 + $0x8] sm:$0xff]
  %s894 = scalar_lea.vmem %s2, 384
  %v895 = vld [vmem:[%s894] sm:$0xf]
  %v896 = vld [vmem:[%s894 + $0x4] sm:$0xf]
  %v897 = vld [vmem:[%s894 + $0x8] sm:$0xf]
  %v898 = vld [vmem:[%s894 + $0xc] sm:$0xf]
  %v899 = vld [vmem:[%s894 + $0x10] sm:$0xf]
  %v900 = vld [vmem:[%s894 + $0x14] sm:$0xf]
  %v901 = vld [vmem:[%s894 + $0x18] sm:$0xf]
  %v902 = vld [vmem:[%s894 + $0x1c] sm:$0xf]
  %v903 = vld [vmem:[%s894 + $0x20] sm:$0xf]
  %v904 = vld [vmem:[%s894 + $0x24] sm:$0xf]
  %v905 = vld [vmem:[%s894 + $0x28] sm:$0xf]
  %v906 = vld [vmem:[%s894 + $0x2c] sm:$0xf]
  %v907 = vld [vmem:[%s894 + $0x30] sm:$0xf]
  %v908 = vld [vmem:[%s894 + $0x34] sm:$0xf]
  %v909 = vld [vmem:[%s894 + $0x38] sm:$0xf]
  %v910 = vld [vmem:[%s894 + $0x3c] sm:$0xf]
  %v911 = vld [vmem:[%s894 + $0x40] sm:$0xf]
  %v912 = vld [vmem:[%s894 + $0x44] sm:$0xf]
  %v913 = vld [vmem:[%s894 + $0x48] sm:$0xf]
  %v914 = vld [vmem:[%s894 + $0x4c] sm:$0xf]
  %v915 = vld [vmem:[%s894 + $0x50] sm:$0xf]
  %v916 = vld [vmem:[%s894 + $0x54] sm:$0xf]
  %v917 = vld [vmem:[%s894 + $0x58] sm:$0xf]
  %v918 = vld [vmem:[%s894 + $0x5c] sm:$0xf]
  %v919 = vld [vmem:[%s894 + $0x60] sm:$0xf]
  %v920 = vld [vmem:[%s894 + $0x64] sm:$0xf]
  %v921 = vld [vmem:[%s894 + $0x68] sm:$0xf]
  %v922 = vld [vmem:[%s894 + $0x6c] sm:$0xf]
  %v923 = vld [vmem:[%s894 + $0x70] sm:$0xf]
  %v924 = vld [vmem:[%s894 + $0x74] sm:$0xf]
  %v925 = vld [vmem:[%s894 + $0x78] sm:$0xf]
  %v926 = vld [vmem:[%s894 + $0x7c] sm:$0xf]
  %s927 = scalar_lea.vmem %s3, 3
  %v928 = vld [vmem:[%s927] sm:$0x1]
  %v930 = vlaneseq
  %v931 = vshrl.u32 %v930, 7
  %v932 = vsub.s32 0, %v931
  %v933 = vrot.slane %v928, %v932
  %v937 = vunpack.c.l.b16 %v892
  %v938 = vunpack.c.h.b16 %v892
  %v939 = vunpack.c.l.b16 %v893
  %v940 = vunpack.c.h.b16 %v893
  %v941 = vpack.c.b16 %v939, %v937
  %v942 = vpack.c.b16 %v940, %v938
  %v977 = vunpack.c.l.b16 %v895
  %v978 = vunpack.c.l.b16 %v896
  %v979 = vunpack.c.l.b16 %v897
  %v980 = vunpack.c.l.b16 %v898
  %v981 = vunpack.c.l.b16 %v899
  %v982 = vunpack.c.l.b16 %v900
  %v983 = vunpack.c.l.b16 %v901
  %v984 = vunpack.c.l.b16 %v902
  %v985 = vunpack.c.l.b16 %v903
  %v986 = vunpack.c.l.b16 %v904
  %v987 = vunpack.c.l.b16 %v905
  %v988 = vunpack.c.l.b16 %v906
  %v989 = vunpack.c.l.b16 %v907
  %v990 = vunpack.c.l.b16 %v908
  %v991 = vunpack.c.l.b16 %v909
  %v992 = vunpack.c.l.b16 %v910
  %v993 = vunpack.c.l.b16 %v911
  %v994 = vunpack.c.l.b16 %v912
  %v995 = vunpack.c.l.b16 %v913
  %v996 = vunpack.c.l.b16 %v914
  %v997 = vunpack.c.l.b16 %v915
  %v998 = vunpack.c.l.b16 %v916
  %v999 = vunpack.c.l.b16 %v917
  %v1000 = vunpack.c.l.b16 %v918
  %v1001 = vunpack.c.l.b16 %v919
  %v1002 = vunpack.c.l.b16 %v920
  %v1003 = vunpack.c.l.b16 %v921
  %v1004 = vunpack.c.l.b16 %v922
  %v1005 = vunpack.c.l.b16 %v923
  %v1006 = vunpack.c.l.b16 %v924
  %v1007 = vunpack.c.l.b16 %v925
  %v1008 = vunpack.c.l.b16 %v926
  %v1009 = vpack.c.b16 %v978, %v977
  %v1010 = vpack.c.b16 %v980, %v979
  %v1011 = vpack.c.b16 %v982, %v981
  %v1012 = vpack.c.b16 %v984, %v983
  %v1013 = vpack.c.b16 %v986, %v985
  %v1014 = vpack.c.b16 %v988, %v987
  %v1015 = vpack.c.b16 %v990, %v989
  %v1016 = vpack.c.b16 %v992, %v991
  %v1017 = vpack.c.b16 %v994, %v993
  %v1018 = vpack.c.b16 %v996, %v995
  %v1019 = vpack.c.b16 %v998, %v997
  %v1020 = vpack.c.b16 %v1000, %v999
  %v1021 = vpack.c.b16 %v1002, %v1001
  %v1022 = vpack.c.b16 %v1004, %v1003
  %v1023 = vpack.c.b16 %v1006, %v1005
  %v1024 = vpack.c.b16 %v1008, %v1007
  %1041 = vmatprep.subr.bf16.mxu0 0
  %1042 = vmatpush1.bf16.msra.mxu0 %v1016
  %1043 = vmatprep.subr.bf16.mxu0 0
  %1044 = vmatpush1.bf16.msra.mxu0 %v1015
  %1045 = vmatprep.subr.bf16.mxu0 0
  %1046 = vmatpush1.bf16.msra.mxu0 %v1014
  %1047 = vmatprep.subr.bf16.mxu0 0
  %1048 = vmatpush1.bf16.msra.mxu0 %v1013
  %1049 = vmatprep.subr.bf16.mxu0 0
  %1050 = vmatpush1.bf16.msra.mxu0 %v1012
  %1051 = vmatprep.subr.bf16.mxu0 0
  %1052 = vmatpush1.bf16.msra.mxu0 %v1011
  %1053 = vmatprep.subr.bf16.mxu0 0
  %1054 = vmatpush1.bf16.msra.mxu0 %v1010
  %1055 = vmatprep.subr.bf16.mxu0 0
  %1056 = vmatpush1.bf16.msra.mxu0 %v1009
  %1057 = vmatprep.subr.bf16.mxu0 0
  %1058 = vmatpush2.bf16.msra.mxu0 %v1024
  %1059 = vmatprep.subr.bf16.mxu0 0
  %1060 = vmatpush2.bf16.msra.mxu0 %v1023
  %1061 = vmatprep.subr.bf16.mxu0 0
  %1062 = vmatpush2.bf16.msra.mxu0 %v1022
  %1063 = vmatprep.subr.bf16.mxu0 0
  %1064 = vmatpush2.bf16.msra.mxu0 %v1021
  %1065 = vmatprep.subr.bf16.mxu0 0
  %1066 = vmatpush2.bf16.msra.mxu0 %v1020
  %1067 = vmatprep.subr.bf16.mxu0 0
  %1068 = vmatpush2.bf16.msra.mxu0 %v1019
  %1069 = vmatprep.subr.bf16.mxu0 0
  %1070 = vmatpush2.bf16.msra.mxu0 %v1018
  %1071 = vmatprep.subr.bf16.mxu0 0
  %1072 = vmatpush2.bf16.msra.mxu0 %v1017
  %1073 = vmatprep.mubr.bf16.mxu0 %v942
  %1074 = vmatmul.mubr.bf16.gmra.mxu0 %v941
  %v1075 = vpop.f32.mrf.mxu0
  %v1076 = vadd.f32 %v933, %v1075
  %v1077 = vpop.f32.mrf.mxu0
  %v1078 = vpop.f32.mrf.mxu0
  %v1079 = vadd.f32 %v933, %v1078
  %v1080 = vpop.f32.mrf.mxu0
  %1081 = vdwg.mxu0
  %vm1082 = vcmp.ge.f32.partialorder %v1076, 0.0
  %vm1083 = vcmp.ge.f32.partialorder %v1079, 0.0
  %v1084 = vmul.f32 %v1076, 0.01
  %v1085 = vmul.f32 %v1079, 0.01
  %v1086 = vsel %vm1082, %v1076, %v1084
  %v1087 = vsel %vm1083, %v1079, %v1085
  %v1088 = vadd.f32 %v1086, %v829
  %v1089 = vadd.f32 %v1087, %v830
  %v1090 = vpack.c.bf16 %v1089, %v1088
  %1091 = vmatprep.subr.bf16.mxu0 0
  %1092 = vmatpush1.bf16.msra.mxu0 0
  %1093 = vmatprep.subr.bf16.mxu0 0
  %1094 = vmatpush1.bf16.msra.mxu0 0
  %1095 = vmatprep.subr.bf16.mxu0 0
  %1096 = vmatpush1.bf16.msra.mxu0 0
  %1097 = vmatprep.subr.bf16.mxu0 0
  %1098 = vmatpush1.bf16.msra.mxu0 0
  %1099 = vmatprep.subr.bf16.mxu0 0
  %1100 = vmatpush1.bf16.msra.mxu0 0
  %1101 = vmatprep.subr.bf16.mxu0 0
  %1102 = vmatpush1.bf16.msra.mxu0 0
  %1103 = vmatprep.subr.bf16.mxu0 0
  %1104 = vmatpush1.bf16.msra.mxu0 0
  %1105 = vmatprep.subr.bf16.mxu0 0
  %1106 = vmatpush1.bf16.msra.mxu0 %v1090
  %1107 = vmatprep.subr.bf16.mxu0 0
  %1108 = vmatpush2.bf16.msra.mxu0 0
  %1109 = vmatprep.subr.bf16.mxu0 0
  %1110 = vmatpush2.bf16.msra.mxu0 0
  %1111 = vmatprep.subr.bf16.mxu0 0
  %1112 = vmatpush2.bf16.msra.mxu0 0
  %1113 = vmatprep.subr.bf16.mxu0 0
  %1114 = vmatpush2.bf16.msra.mxu0 0
  %1115 = vmatprep.subr.bf16.mxu0 0
  %1116 = vmatpush2.bf16.msra.mxu0 0
  %1117 = vmatprep.subr.bf16.mxu0 0
  %1118 = vmatpush2.bf16.msra.mxu0 0
  %1119 = vmatprep.subr.bf16.mxu0 0
  %1120 = vmatpush2.bf16.msra.mxu0 0
  %1121 = vmatprep.subr.bf16.mxu0 0
  %1122 = vmatpush2.bf16.msra.mxu0 0
  %1123 = vmatprep.mubr.bf16.mxu0 0
  %1124 = vmatmul.mubr.bf16.gmra.mxu0 %v57
  %v1125 = vpop.f32.mrf.mxu0
  %v1126 = vadd.f32 0.0, %v1125
  %v1127 = vpop.f32.mrf.mxu0
  %v1128 = vpop.f32.mrf.mxu0
  %v1129 = vadd.f32 0.0, %v1128
  %v1130 = vpop.f32.mrf.mxu0
  %1131 = vdwg.mxu0
  %v1133 = vunpack.c.l.b16 %v1090
  %v1134 = vunpack.c.h.b16 %v1090
  %v1135 = vpack.c.b16 %v1133, %v1133
  %v1136 = vpack.c.b16 %v1134, %v1134
  %1139 = vst [vmem:[#allocation2] sm:$0xf] %v1135
  %1140 = vst [vmem:[#allocation2 + $0x8] sm:$0xf] %v1136
  %v1141 = vpack.c.bf16 %v1129, %v1126
  %v1143 = vunpack.c.l.b16 %v1141
  %v1144 = vunpack.c.h.b16 %v1141
  %v1145 = vpack.c.b16 %v1143, %v1143
  %v1146 = vpack.c.b16 %v1144, %v1144
  %1149 = vst [vmem:[#allocation2 + $0x4] sm:$0xf] %v1145
  %1150 = vst [vmem:[#allocation2 + $0xc] sm:$0xf] %v1146
  %v1151 = vld [vmem:[#allocation2] sm:$0xff]
  %v1152 = vld [vmem:[#allocation2 + $0x8] sm:$0xff]
  %s1153 = scalar_lea.vmem %s2, 512
  %v1154 = vld [vmem:[%s1153] sm:$0xf]
  %v1155 = vld [vmem:[%s1153 + $0x4] sm:$0xf]
  %v1156 = vld [vmem:[%s1153 + $0x8] sm:$0xf]
  %v1157 = vld [vmem:[%s1153 + $0xc] sm:$0xf]
  %v1158 = vld [vmem:[%s1153 + $0x10] sm:$0xf]
  %v1159 = vld [vmem:[%s1153 + $0x14] sm:$0xf]
  %v1160 = vld [vmem:[%s1153 + $0x18] sm:$0xf]
  %v1161 = vld [vmem:[%s1153 + $0x1c] sm:$0xf]
  %v1162 = vld [vmem:[%s1153 + $0x20] sm:$0xf]
  %v1163 = vld [vmem:[%s1153 + $0x24] sm:$0xf]
  %v1164 = vld [vmem:[%s1153 + $0x28] sm:$0xf]
  %v1165 = vld [vmem:[%s1153 + $0x2c] sm:$0xf]
  %v1166 = vld [vmem:[%s1153 + $0x30] sm:$0xf]
  %v1167 = vld [vmem:[%s1153 + $0x34] sm:$0xf]
  %v1168 = vld [vmem:[%s1153 + $0x38] sm:$0xf]
  %v1169 = vld [vmem:[%s1153 + $0x3c] sm:$0xf]
  %v1170 = vld [vmem:[%s1153 + $0x40] sm:$0xf]
  %v1171 = vld [vmem:[%s1153 + $0x44] sm:$0xf]
  %v1172 = vld [vmem:[%s1153 + $0x48] sm:$0xf]
  %v1173 = vld [vmem:[%s1153 + $0x4c] sm:$0xf]
  %v1174 = vld [vmem:[%s1153 + $0x50] sm:$0xf]
  %v1175 = vld [vmem:[%s1153 + $0x54] sm:$0xf]
  %v1176 = vld [vmem:[%s1153 + $0x58] sm:$0xf]
  %v1177 = vld [vmem:[%s1153 + $0x5c] sm:$0xf]
  %v1178 = vld [vmem:[%s1153 + $0x60] sm:$0xf]
  %v1179 = vld [vmem:[%s1153 + $0x64] sm:$0xf]
  %v1180 = vld [vmem:[%s1153 + $0x68] sm:$0xf]
  %v1181 = vld [vmem:[%s1153 + $0x6c] sm:$0xf]
  %v1182 = vld [vmem:[%s1153 + $0x70] sm:$0xf]
  %v1183 = vld [vmem:[%s1153 + $0x74] sm:$0xf]
  %v1184 = vld [vmem:[%s1153 + $0x78] sm:$0xf]
  %v1185 = vld [vmem:[%s1153 + $0x7c] sm:$0xf]
  %s1186 = scalar_lea.vmem %s3, 4
  %v1187 = vld [vmem:[%s1186] sm:$0x1]
  %v1189 = vlaneseq
  %v1190 = vshrl.u32 %v1189, 7
  %v1191 = vsub.s32 0, %v1190
  %v1192 = vrot.slane %v1187, %v1191
  %v1196 = vunpack.c.l.b16 %v1151
  %v1197 = vunpack.c.h.b16 %v1151
  %v1198 = vunpack.c.l.b16 %v1152
  %v1199 = vunpack.c.h.b16 %v1152
  %v1200 = vpack.c.b16 %v1198, %v1196
  %v1201 = vpack.c.b16 %v1199, %v1197
  %v1236 = vunpack.c.l.b16 %v1154
  %v1237 = vunpack.c.l.b16 %v1155
  %v1238 = vunpack.c.l.b16 %v1156
  %v1239 = vunpack.c.l.b16 %v1157
  %v1240 = vunpack.c.l.b16 %v1158
  %v1241 = vunpack.c.l.b16 %v1159
  %v1242 = vunpack.c.l.b16 %v1160
  %v1243 = vunpack.c.l.b16 %v1161
  %v1244 = vunpack.c.l.b16 %v1162
  %v1245 = vunpack.c.l.b16 %v1163
  %v1246 = vunpack.c.l.b16 %v1164
  %v1247 = vunpack.c.l.b16 %v1165
  %v1248 = vunpack.c.l.b16 %v1166
  %v1249 = vunpack.c.l.b16 %v1167
  %v1250 = vunpack.c.l.b16 %v1168
  %v1251 = vunpack.c.l.b16 %v1169
  %v1252 = vunpack.c.l.b16 %v1170
  %v1253 = vunpack.c.l.b16 %v1171
  %v1254 = vunpack.c.l.b16 %v1172
  %v1255 = vunpack.c.l.b16 %v1173
  %v1256 = vunpack.c.l.b16 %v1174
  %v1257 = vunpack.c.l.b16 %v1175
  %v1258 = vunpack.c.l.b16 %v1176
  %v1259 = vunpack.c.l.b16 %v1177
  %v1260 = vunpack.c.l.b16 %v1178
  %v1261 = vunpack.c.l.b16 %v1179
  %v1262 = vunpack.c.l.b16 %v1180
  %v1263 = vunpack.c.l.b16 %v1181
  %v1264 = vunpack.c.l.b16 %v1182
  %v1265 = vunpack.c.l.b16 %v1183
  %v1266 = vunpack.c.l.b16 %v1184
  %v1267 = vunpack.c.l.b16 %v1185
  %v1268 = vpack.c.b16 %v1237, %v1236
  %v1269 = vpack.c.b16 %v1239, %v1238
  %v1270 = vpack.c.b16 %v1241, %v1240
  %v1271 = vpack.c.b16 %v1243, %v1242
  %v1272 = vpack.c.b16 %v1245, %v1244
  %v1273 = vpack.c.b16 %v1247, %v1246
  %v1274 = vpack.c.b16 %v1249, %v1248
  %v1275 = vpack.c.b16 %v1251, %v1250
  %v1276 = vpack.c.b16 %v1253, %v1252
  %v1277 = vpack.c.b16 %v1255, %v1254
  %v1278 = vpack.c.b16 %v1257, %v1256
  %v1279 = vpack.c.b16 %v1259, %v1258
  %v1280 = vpack.c.b16 %v1261, %v1260
  %v1281 = vpack.c.b16 %v1263, %v1262
  %v1282 = vpack.c.b16 %v1265, %v1264
  %v1283 = vpack.c.b16 %v1267, %v1266
  %1300 = vmatprep.subr.bf16.mxu0 0
  %1301 = vmatpush1.bf16.msra.mxu0 %v1275
  %1302 = vmatprep.subr.bf16.mxu0 0
  %1303 = vmatpush1.bf16.msra.mxu0 %v1274
  %1304 = vmatprep.subr.bf16.mxu0 0
  %1305 = vmatpush1.bf16.msra.mxu0 %v1273
  %1306 = vmatprep.subr.bf16.mxu0 0
  %1307 = vmatpush1.bf16.msra.mxu0 %v1272
  %1308 = vmatprep.subr.bf16.mxu0 0
  %1309 = vmatpush1.bf16.msra.mxu0 %v1271
  %1310 = vmatprep.subr.bf16.mxu0 0
  %1311 = vmatpush1.bf16.msra.mxu0 %v1270
  %1312 = vmatprep.subr.bf16.mxu0 0
  %1313 = vmatpush1.bf16.msra.mxu0 %v1269
  %1314 = vmatprep.subr.bf16.mxu0 0
  %1315 = vmatpush1.bf16.msra.mxu0 %v1268
  %1316 = vmatprep.subr.bf16.mxu0 0
  %1317 = vmatpush2.bf16.msra.mxu0 %v1283
  %1318 = vmatprep.subr.bf16.mxu0 0
  %1319 = vmatpush2.bf16.msra.mxu0 %v1282
  %1320 = vmatprep.subr.bf16.mxu0 0
  %1321 = vmatpush2.bf16.msra.mxu0 %v1281
  %1322 = vmatprep.subr.bf16.mxu0 0
  %1323 = vmatpush2.bf16.msra.mxu0 %v1280
  %1324 = vmatprep.subr.bf16.mxu0 0
  %1325 = vmatpush2.bf16.msra.mxu0 %v1279
  %1326 = vmatprep.subr.bf16.mxu0 0
  %1327 = vmatpush2.bf16.msra.mxu0 %v1278
  %1328 = vmatprep.subr.bf16.mxu0 0
  %1329 = vmatpush2.bf16.msra.mxu0 %v1277
  %1330 = vmatprep.subr.bf16.mxu0 0
  %1331 = vmatpush2.bf16.msra.mxu0 %v1276
  %1332 = vmatprep.mubr.bf16.mxu0 %v1201
  %1333 = vmatmul.mubr.bf16.gmra.mxu0 %v1200
  %v1334 = vpop.f32.mrf.mxu0
  %v1335 = vadd.f32 %v1192, %v1334
  %v1336 = vpop.f32.mrf.mxu0
  %v1337 = vpop.f32.mrf.mxu0
  %v1338 = vadd.f32 %v1192, %v1337
  %v1339 = vpop.f32.mrf.mxu0
  %1340 = vdwg.mxu0
  %vm1341 = vcmp.ge.f32.partialorder %v1335, 0.0
  %vm1342 = vcmp.ge.f32.partialorder %v1338, 0.0
  %v1343 = vmul.f32 %v1335, 0.01
  %v1344 = vmul.f32 %v1338, 0.01
  %v1345 = vsel %vm1341, %v1335, %v1343
  %v1346 = vsel %vm1342, %v1338, %v1344
  %v1347 = vadd.f32 %v1345, %v1088
  %v1348 = vadd.f32 %v1346, %v1089
  %v1349 = vpack.c.bf16 %v1348, %v1347
  %1350 = vmatprep.subr.bf16.mxu0 0
  %1351 = vmatpush1.bf16.msra.mxu0 0
  %1352 = vmatprep.subr.bf16.mxu0 0
  %1353 = vmatpush1.bf16.msra.mxu0 0
  %1354 = vmatprep.subr.bf16.mxu0 0
  %1355 = vmatpush1.bf16.msra.mxu0 0
  %1356 = vmatprep.subr.bf16.mxu0 0
  %1357 = vmatpush1.bf16.msra.mxu0 0
  %1358 = vmatprep.subr.bf16.mxu0 0
  %1359 = vmatpush1.bf16.msra.mxu0 0
  %1360 = vmatprep.subr.bf16.mxu0 0
  %1361 = vmatpush1.bf16.msra.mxu0 0
  %1362 = vmatprep.subr.bf16.mxu0 0
  %1363 = vmatpush1.bf16.msra.mxu0 0
  %1364 = vmatprep.subr.bf16.mxu0 0
  %1365 = vmatpush1.bf16.msra.mxu0 %v1349
  %1366 = vmatprep.subr.bf16.mxu0 0
  %1367 = vmatpush2.bf16.msra.mxu0 0
  %1368 = vmatprep.subr.bf16.mxu0 0
  %1369 = vmatpush2.bf16.msra.mxu0 0
  %1370 = vmatprep.subr.bf16.mxu0 0
  %1371 = vmatpush2.bf16.msra.mxu0 0
  %1372 = vmatprep.subr.bf16.mxu0 0
  %1373 = vmatpush2.bf16.msra.mxu0 0
  %1374 = vmatprep.subr.bf16.mxu0 0
  %1375 = vmatpush2.bf16.msra.mxu0 0
  %1376 = vmatprep.subr.bf16.mxu0 0
  %1377 = vmatpush2.bf16.msra.mxu0 0
  %1378 = vmatprep.subr.bf16.mxu0 0
  %1379 = vmatpush2.bf16.msra.mxu0 0
  %1380 = vmatprep.subr.bf16.mxu0 0
  %1381 = vmatpush2.bf16.msra.mxu0 0
  %1382 = vmatprep.mubr.bf16.mxu0 0
  %1383 = vmatmul.mubr.bf16.gmra.mxu0 %v57
  %v1384 = vpop.f32.mrf.mxu0
  %v1385 = vadd.f32 0.0, %v1384
  %v1386 = vpop.f32.mrf.mxu0
  %v1387 = vpop.f32.mrf.mxu0
  %v1388 = vadd.f32 0.0, %v1387
  %v1389 = vpop.f32.mrf.mxu0
  %1390 = vdwg.mxu0
  %v1392 = vunpack.c.l.b16 %v1349
  %v1393 = vunpack.c.h.b16 %v1349
  %v1394 = vpack.c.b16 %v1392, %v1392
  %v1395 = vpack.c.b16 %v1393, %v1393
  %1398 = vst [vmem:[#allocation2] sm:$0xf] %v1394
  %1399 = vst [vmem:[#allocation2 + $0x8] sm:$0xf] %v1395
  %v1400 = vpack.c.bf16 %v1388, %v1385
  %v1402 = vunpack.c.l.b16 %v1400
  %v1403 = vunpack.c.h.b16 %v1400
  %v1404 = vpack.c.b16 %v1402, %v1402
  %v1405 = vpack.c.b16 %v1403, %v1403
  %1408 = vst [vmem:[#allocation2 + $0x4] sm:$0xf] %v1404
  %1409 = vst [vmem:[#allocation2 + $0xc] sm:$0xf] %v1405
  %v1410 = vld [vmem:[#allocation2] sm:$0xff]
  %v1411 = vld [vmem:[#allocation2 + $0x8] sm:$0xff]
  %s1412 = scalar_lea.vmem %s2, 640
  %v1413 = vld [vmem:[%s1412] sm:$0xf]
  %v1414 = vld [vmem:[%s1412 + $0x4] sm:$0xf]
  %v1415 = vld [vmem:[%s1412 + $0x8] sm:$0xf]
  %v1416 = vld [vmem:[%s1412 + $0xc] sm:$0xf]
  %v1417 = vld [vmem:[%s1412 + $0x10] sm:$0xf]
  %v1418 = vld [vmem:[%s1412 + $0x14] sm:$0xf]
  %v1419 = vld [vmem:[%s1412 + $0x18] sm:$0xf]
  %v1420 = vld [vmem:[%s1412 + $0x1c] sm:$0xf]
  %v1421 = vld [vmem:[%s1412 + $0x20] sm:$0xf]
  %v1422 = vld [vmem:[%s1412 + $0x24] sm:$0xf]
  %v1423 = vld [vmem:[%s1412 + $0x28] sm:$0xf]
  %v1424 = vld [vmem:[%s1412 + $0x2c] sm:$0xf]
  %v1425 = vld [vmem:[%s1412 + $0x30] sm:$0xf]
  %v1426 = vld [vmem:[%s1412 + $0x34] sm:$0xf]
  %v1427 = vld [vmem:[%s1412 + $0x38] sm:$0xf]
  %v1428 = vld [vmem:[%s1412 + $0x3c] sm:$0xf]
  %v1429 = vld [vmem:[%s1412 + $0x40] sm:$0xf]
  %v1430 = vld [vmem:[%s1412 + $0x44] sm:$0xf]
  %v1431 = vld [vmem:[%s1412 + $0x48] sm:$0xf]
  %v1432 = vld [vmem:[%s1412 + $0x4c] sm:$0xf]
  %v1433 = vld [vmem:[%s1412 + $0x50] sm:$0xf]
  %v1434 = vld [vmem:[%s1412 + $0x54] sm:$0xf]
  %v1435 = vld [vmem:[%s1412 + $0x58] sm:$0xf]
  %v1436 = vld [vmem:[%s1412 + $0x5c] sm:$0xf]
  %v1437 = vld [vmem:[%s1412 + $0x60] sm:$0xf]
  %v1438 = vld [vmem:[%s1412 + $0x64] sm:$0xf]
  %v1439 = vld [vmem:[%s1412 + $0x68] sm:$0xf]
  %v1440 = vld [vmem:[%s1412 + $0x6c] sm:$0xf]
  %v1441 = vld [vmem:[%s1412 + $0x70] sm:$0xf]
  %v1442 = vld [vmem:[%s1412 + $0x74] sm:$0xf]
  %v1443 = vld [vmem:[%s1412 + $0x78] sm:$0xf]
  %v1444 = vld [vmem:[%s1412 + $0x7c] sm:$0xf]
  %s1445 = scalar_lea.vmem %s3, 5
  %v1446 = vld [vmem:[%s1445] sm:$0x1]
  %v1448 = vlaneseq
  %v1449 = vshrl.u32 %v1448, 7
  %v1450 = vsub.s32 0, %v1449
  %v1451 = vrot.slane %v1446, %v1450
  %v1455 = vunpack.c.l.b16 %v1410
  %v1456 = vunpack.c.h.b16 %v1410
  %v1457 = vunpack.c.l.b16 %v1411
  %v1458 = vunpack.c.h.b16 %v1411
  %v1459 = vpack.c.b16 %v1457, %v1455
  %v1460 = vpack.c.b16 %v1458, %v1456
  %v1495 = vunpack.c.l.b16 %v1413
  %v1496 = vunpack.c.l.b16 %v1414
  %v1497 = vunpack.c.l.b16 %v1415
  %v1498 = vunpack.c.l.b16 %v1416
  %v1499 = vunpack.c.l.b16 %v1417
  %v1500 = vunpack.c.l.b16 %v1418
  %v1501 = vunpack.c.l.b16 %v1419
  %v1502 = vunpack.c.l.b16 %v1420
  %v1503 = vunpack.c.l.b16 %v1421
  %v1504 = vunpack.c.l.b16 %v1422
  %v1505 = vunpack.c.l.b16 %v1423
  %v1506 = vunpack.c.l.b16 %v1424
  %v1507 = vunpack.c.l.b16 %v1425
  %v1508 = vunpack.c.l.b16 %v1426
  %v1509 = vunpack.c.l.b16 %v1427
  %v1510 = vunpack.c.l.b16 %v1428
  %v1511 = vunpack.c.l.b16 %v1429
  %v1512 = vunpack.c.l.b16 %v1430
  %v1513 = vunpack.c.l.b16 %v1431
  %v1514 = vunpack.c.l.b16 %v1432
  %v1515 = vunpack.c.l.b16 %v1433
  %v1516 = vunpack.c.l.b16 %v1434
  %v1517 = vunpack.c.l.b16 %v1435
  %v1518 = vunpack.c.l.b16 %v1436
  %v1519 = vunpack.c.l.b16 %v1437
  %v1520 = vunpack.c.l.b16 %v1438
  %v1521 = vunpack.c.l.b16 %v1439
  %v1522 = vunpack.c.l.b16 %v1440
  %v1523 = vunpack.c.l.b16 %v1441
  %v1524 = vunpack.c.l.b16 %v1442
  %v1525 = vunpack.c.l.b16 %v1443
  %v1526 = vunpack.c.l.b16 %v1444
  %v1527 = vpack.c.b16 %v1496, %v1495
  %v1528 = vpack.c.b16 %v1498, %v1497
  %v1529 = vpack.c.b16 %v1500, %v1499
  %v1530 = vpack.c.b16 %v1502, %v1501
  %v1531 = vpack.c.b16 %v1504, %v1503
  %v1532 = vpack.c.b16 %v1506, %v1505
  %v1533 = vpack.c.b16 %v1508, %v1507
  %v1534 = vpack.c.b16 %v1510, %v1509
  %v1535 = vpack.c.b16 %v1512, %v1511
  %v1536 = vpack.c.b16 %v1514, %v1513
  %v1537 = vpack.c.b16 %v1516, %v1515
  %v1538 = vpack.c.b16 %v1518, %v1517
  %v1539 = vpack.c.b16 %v1520, %v1519
  %v1540 = vpack.c.b16 %v1522, %v1521
  %v1541 = vpack.c.b16 %v1524, %v1523
  %v1542 = vpack.c.b16 %v1526, %v1525
  %1559 = vmatprep.subr.bf16.mxu0 0
  %1560 = vmatpush1.bf16.msra.mxu0 %v1534
  %1561 = vmatprep.subr.bf16.mxu0 0
  %1562 = vmatpush1.bf16.msra.mxu0 %v1533
  %1563 = vmatprep.subr.bf16.mxu0 0
  %1564 = vmatpush1.bf16.msra.mxu0 %v1532
  %1565 = vmatprep.subr.bf16.mxu0 0
  %1566 = vmatpush1.bf16.msra.mxu0 %v1531
  %1567 = vmatprep.subr.bf16.mxu0 0
  %1568 = vmatpush1.bf16.msra.mxu0 %v1530
  %1569 = vmatprep.subr.bf16.mxu0 0
  %1570 = vmatpush1.bf16.msra.mxu0 %v1529
  %1571 = vmatprep.subr.bf16.mxu0 0
  %1572 = vmatpush1.bf16.msra.mxu0 %v1528
  %1573 = vmatprep.subr.bf16.mxu0 0
  %1574 = vmatpush1.bf16.msra.mxu0 %v1527
  %1575 = vmatprep.subr.bf16.mxu0 0
  %1576 = vmatpush2.bf16.msra.mxu0 %v1542
  %1577 = vmatprep.subr.bf16.mxu0 0
  %1578 = vmatpush2.bf16.msra.mxu0 %v1541
  %1579 = vmatprep.subr.bf16.mxu0 0
  %1580 = vmatpush2.bf16.msra.mxu0 %v1540
  %1581 = vmatprep.subr.bf16.mxu0 0
  %1582 = vmatpush2.bf16.msra.mxu0 %v1539
  %1583 = vmatprep.subr.bf16.mxu0 0
  %1584 = vmatpush2.bf16.msra.mxu0 %v1538
  %1585 = vmatprep.subr.bf16.mxu0 0
  %1586 = vmatpush2.bf16.msra.mxu0 %v1537
  %1587 = vmatprep.subr.bf16.mxu0 0
  %1588 = vmatpush2.bf16.msra.mxu0 %v1536
  %1589 = vmatprep.subr.bf16.mxu0 0
  %1590 = vmatpush2.bf16.msra.mxu0 %v1535
  %1591 = vmatprep.mubr.bf16.mxu0 %v1460
  %1592 = vmatmul.mubr.bf16.gmra.mxu0 %v1459
  %v1593 = vpop.f32.mrf.mxu0
  %v1594 = vadd.f32 %v1451, %v1593
  %v1595 = vpop.f32.mrf.mxu0
  %v1596 = vpop.f32.mrf.mxu0
  %v1597 = vadd.f32 %v1451, %v1596
  %v1598 = vpop.f32.mrf.mxu0
  %1599 = vdwg.mxu0
  %vm1600 = vcmp.ge.f32.partialorder %v1594, 0.0
  %vm1601 = vcmp.ge.f32.partialorder %v1597, 0.0
  %v1602 = vmul.f32 %v1594, 0.01
  %v1603 = vmul.f32 %v1597, 0.01
  %v1604 = vsel %vm1600, %v1594, %v1602
  %v1605 = vsel %vm1601, %v1597, %v1603
  %v1606 = vadd.f32 %v1604, %v1347
  %v1607 = vadd.f32 %v1605, %v1348
  %v1608 = vld [vmem:[%s4] sm:$0x1]
  %v1609 = vpack.c.bf16 %v1607, %v1606
  %v1611 = vsel %vm55, %v1608, 0
  %1613 = vmatprep.subr.bf16.mxu0 0
  %1614 = vmatpush1.bf16.msra.mxu0 0
  %1615 = vmatprep.subr.bf16.mxu0 0
  %1616 = vmatpush1.bf16.msra.mxu0 0
  %1617 = vmatprep.subr.bf16.mxu0 0
  %1618 = vmatpush1.bf16.msra.mxu0 0
  %1619 = vmatprep.subr.bf16.mxu0 0
  %1620 = vmatpush1.bf16.msra.mxu0 0
  %1621 = vmatprep.subr.bf16.mxu0 0
  %1622 = vmatpush1.bf16.msra.mxu0 0
  %1623 = vmatprep.subr.bf16.mxu0 0
  %1624 = vmatpush1.bf16.msra.mxu0 0
  %1625 = vmatprep.subr.bf16.mxu0 0
  %1626 = vmatpush1.bf16.msra.mxu0 0
  %1627 = vmatprep.subr.bf16.mxu0 0
  %1628 = vmatpush1.bf16.msra.mxu0 %v1609
  %1629 = vmatprep.subr.bf16.mxu0 0
  %1630 = vmatpush2.bf16.msra.mxu0 0
  %1631 = vmatprep.subr.bf16.mxu0 0
  %1632 = vmatpush2.bf16.msra.mxu0 0
  %1633 = vmatprep.subr.bf16.mxu0 0
  %1634 = vmatpush2.bf16.msra.mxu0 0
  %1635 = vmatprep.subr.bf16.mxu0 0
  %1636 = vmatpush2.bf16.msra.mxu0 0
  %1637 = vmatprep.subr.bf16.mxu0 0
  %1638 = vmatpush2.bf16.msra.mxu0 0
  %1639 = vmatprep.subr.bf16.mxu0 0
  %1640 = vmatpush2.bf16.msra.mxu0 0
  %1641 = vmatprep.subr.bf16.mxu0 0
  %1642 = vmatpush2.bf16.msra.mxu0 0
  %1643 = vmatprep.subr.bf16.mxu0 0
  %1644 = vmatpush2.bf16.msra.mxu0 0
  %1645 = vmatprep.mubr.bf16.mxu0 0
  %1646 = vmatmul.mubr.bf16.gmra.mxu0 %v1611
  %v1647 = vpop.f32.mrf.mxu0
  %v1648 = vadd.f32 0.0, %v1647
  %v1649 = vpop.f32.mrf.mxu0
  %v1650 = vpop.f32.mrf.mxu0
  %v1651 = vpop.f32.mrf.mxu0
  %1652 = vdwg.mxu0
  %v1653 = vpack.c.bf16 %v1648, %v1648
  %v1654 = vld [vmem:[%s5] sm:$0xff]
  %v1655 = vld [vmem:[%s5 + $0x8] sm:$0xff]
  %v1656 = vld [vmem:[%s5 + $0x10] sm:$0xff]
  %v1657 = vld [vmem:[%s5 + $0x18] sm:$0xff]
  %v1658 = vld [vmem:[%s5 + $0x20] sm:$0xff]
  %v1659 = vld [vmem:[%s5 + $0x28] sm:$0xff]
  %v1660 = vld [vmem:[%s5 + $0x30] sm:$0xff]
  %v1661 = vld [vmem:[%s5 + $0x38] sm:$0xff]
  %v1662 = vld [vmem:[%s5 + $0x40] sm:$0xff]
  %v1663 = vld [vmem:[%s5 + $0x48] sm:$0xff]
  %v1664 = vld [vmem:[%s5 + $0x50] sm:$0xff]
  %v1665 = vld [vmem:[%s5 + $0x58] sm:$0xff]
  %v1666 = vld [vmem:[%s5 + $0x60] sm:$0xff]
  %v1667 = vld [vmem:[%s5 + $0x68] sm:$0xff]
  %v1668 = vld [vmem:[%s5 + $0x70] sm:$0xff]
  %v1669 = vld [vmem:[%s5 + $0x78] sm:$0xff]
  %v1670 = vld [vmem:[%s6] sm:$0x3]
  %v1672 = vlaneseq
  %v1673 = vshrl.u32 %v1672, 7
  %v1674 = vsub.s32 0, %v1673
  %v1675 = vrot.slane %v1670, %v1674
  %v1676 = vlaneseq
  %v1677 = vshrl.u32 %v1676, 7
  %v1678 = vsub.s32 1, %v1677
  %v1679 = vrot.slane %v1670, %v1678
  %v1698 = vunpack.c.l.b16 %v1654
  %v1699 = vunpack.c.h.b16 %v1654
  %v1700 = vunpack.c.l.b16 %v1655
  %v1701 = vunpack.c.h.b16 %v1655
  %v1702 = vunpack.c.l.b16 %v1656
  %v1703 = vunpack.c.h.b16 %v1656
  %v1704 = vunpack.c.l.b16 %v1657
  %v1705 = vunpack.c.h.b16 %v1657
  %v1706 = vunpack.c.l.b16 %v1658
  %v1707 = vunpack.c.h.b16 %v1658
  %v1708 = vunpack.c.l.b16 %v1659
  %v1709 = vunpack.c.h.b16 %v1659
  %v1710 = vunpack.c.l.b16 %v1660
  %v1711 = vunpack.c.h.b16 %v1660
  %v1712 = vunpack.c.l.b16 %v1661
  %v1713 = vunpack.c.h.b16 %v1661
  %v1714 = vunpack.c.l.b16 %v1662
  %v1715 = vunpack.c.h.b16 %v1662
  %v1716 = vunpack.c.l.b16 %v1663
  %v1717 = vunpack.c.h.b16 %v1663
  %v1718 = vunpack.c.l.b16 %v1664
  %v1719 = vunpack.c.h.b16 %v1664
  %v1720 = vunpack.c.l.b16 %v1665
  %v1721 = vunpack.c.h.b16 %v1665
  %v1722 = vunpack.c.l.b16 %v1666
  %v1723 = vunpack.c.h.b16 %v1666
  %v1724 = vunpack.c.l.b16 %v1667
  %v1725 = vunpack.c.h.b16 %v1667
  %v1726 = vunpack.c.l.b16 %v1668
  %v1727 = vunpack.c.h.b16 %v1668
  %v1728 = vunpack.c.l.b16 %v1669
  %v1729 = vunpack.c.h.b16 %v1669
  %v1730 = vpack.c.b16 %v1700, %v1698
  %v1731 = vpack.c.b16 %v1701, %v1699
  %v1732 = vpack.c.b16 %v1704, %v1702
  %v1733 = vpack.c.b16 %v1705, %v1703
  %v1734 = vpack.c.b16 %v1708, %v1706
  %v1735 = vpack.c.b16 %v1709, %v1707
  %v1736 = vpack.c.b16 %v1712, %v1710
  %v1737 = vpack.c.b16 %v1713, %v1711
  %v1738 = vpack.c.b16 %v1716, %v1714
  %v1739 = vpack.c.b16 %v1717, %v1715
  %v1740 = vpack.c.b16 %v1720, %v1718
  %v1741 = vpack.c.b16 %v1721, %v1719
  %v1742 = vpack.c.b16 %v1724, %v1722
  %v1743 = vpack.c.b16 %v1725, %v1723
  %v1744 = vpack.c.b16 %v1728, %v1726
  %v1745 = vpack.c.b16 %v1729, %v1727
  %1762 = vmatprep.subr.bf16.mxu0 %v1745
  %1763 = vmatpush1.bf16.msra.mxu0 %v1744
  %1764 = vmatprep.subr.bf16.mxu0 %v1743
  %1765 = vmatpush1.bf16.msra.mxu0 %v1742
  %1766 = vmatprep.subr.bf16.mxu0 %v1741
  %1767 = vmatpush1.bf16.msra.mxu0 %v1740
  %1768 = vmatprep.subr.bf16.mxu0 %v1739
  %1769 = vmatpush1.bf16.msra.mxu0 %v1738
  %1770 = vmatprep.subr.bf16.mxu0 %v1737
  %1771 = vmatpush1.bf16.msra.mxu0 %v1736
  %1772 = vmatprep.subr.bf16.mxu0 %v1735
  %1773 = vmatpush1.bf16.msra.mxu0 %v1734
  %1774 = vmatprep.subr.bf16.mxu0 %v1733
  %1775 = vmatpush1.bf16.msra.mxu0 %v1732
  %1776 = vmatprep.subr.bf16.mxu0 %v1731
  %1777 = vmatpush1.bf16.msra.mxu0 %v1730
  %1778 = vmatprep.subr.bf16.mxu0 0
  %1779 = vmatpush2.bf16.msra.mxu0 0
  %1780 = vmatprep.subr.bf16.mxu0 0
  %1781 = vmatpush2.bf16.msra.mxu0 0
  %1782 = vmatprep.subr.bf16.mxu0 0
  %1783 = vmatpush2.bf16.msra.mxu0 0
  %1784 = vmatprep.subr.bf16.mxu0 0
  %1785 = vmatpush2.bf16.msra.mxu0 0
  %1786 = vmatprep.subr.bf16.mxu0 0
  %1787 = vmatpush2.bf16.msra.mxu0 0
  %1788 = vmatprep.subr.bf16.mxu0 0
  %1789 = vmatpush2.bf16.msra.mxu0 0
  %1790 = vmatprep.subr.bf16.mxu0 0
  %1791 = vmatpush2.bf16.msra.mxu0 0
  %1792 = vmatprep.subr.bf16.mxu0 0
  %1793 = vmatpush2.bf16.msra.mxu0 0
  %1794 = vmatprep.mubr.bf16.mxu0 0
  %1795 = vmatmul.mubr.bf16.gmra.mxu0 %v1653
  %v1796 = vpop.f32.mrf.mxu0
  %v1797 = vadd.f32 %v1675, %v1796
  %v1798 = vpop.f32.mrf.mxu0
  %v1799 = vadd.f32 %v1679, %v1798
  %v1800 = vpop.f32.mrf.mxu0
  %v1801 = vpop.f32.mrf.mxu0
  %1802 = vdwg.mxu0
  %vm1803 = vcmp.ge.f32.partialorder %v1797, 0.0
  %vm1804 = vcmp.ge.f32.partialorder %v1799, 0.0
  %v1805 = vmul.f32 %v1797, 0.01
  %v1806 = vmul.f32 %v1799, 0.01
  %v1807 = vsel %vm1803, %v1797, %v1805
  %v1808 = vsel %vm1804, %v1799, %v1806
  %v1809 = vpack.c.bf16 %v1807, %v1807
  %v1810 = vpack.c.bf16 %v1808, %v1808
  %v1811 = vld [vmem:[%s7] sm:$0xf]
  %v1812 = vld [vmem:[%s7 + $0x4] sm:$0xf]
  %v1813 = vld [vmem:[%s7 + $0x8] sm:$0xf]
  %v1814 = vld [vmem:[%s7 + $0xc] sm:$0xf]
  %v1815 = vld [vmem:[%s7 + $0x10] sm:$0xf]
  %v1816 = vld [vmem:[%s7 + $0x14] sm:$0xf]
  %v1817 = vld [vmem:[%s7 + $0x18] sm:$0xf]
  %v1818 = vld [vmem:[%s7 + $0x1c] sm:$0xf]
  %v1819 = vld [vmem:[%s7 + $0x20] sm:$0xf]
  %v1820 = vld [vmem:[%s7 + $0x24] sm:$0xf]
  %v1821 = vld [vmem:[%s7 + $0x28] sm:$0xf]
  %v1822 = vld [vmem:[%s7 + $0x2c] sm:$0xf]
  %v1823 = vld [vmem:[%s7 + $0x30] sm:$0xf]
  %v1824 = vld [vmem:[%s7 + $0x34] sm:$0xf]
  %v1825 = vld [vmem:[%s7 + $0x38] sm:$0xf]
  %v1826 = vld [vmem:[%s7 + $0x3c] sm:$0xf]
  %v1827 = vld [vmem:[%s7 + $0x40] sm:$0xf]
  %v1828 = vld [vmem:[%s7 + $0x44] sm:$0xf]
  %v1829 = vld [vmem:[%s7 + $0x48] sm:$0xf]
  %v1830 = vld [vmem:[%s7 + $0x4c] sm:$0xf]
  %v1831 = vld [vmem:[%s7 + $0x50] sm:$0xf]
  %v1832 = vld [vmem:[%s7 + $0x54] sm:$0xf]
  %v1833 = vld [vmem:[%s7 + $0x58] sm:$0xf]
  %v1834 = vld [vmem:[%s7 + $0x5c] sm:$0xf]
  %v1835 = vld [vmem:[%s7 + $0x60] sm:$0xf]
  %v1836 = vld [vmem:[%s7 + $0x64] sm:$0xf]
  %v1837 = vld [vmem:[%s7 + $0x68] sm:$0xf]
  %v1838 = vld [vmem:[%s7 + $0x6c] sm:$0xf]
  %v1839 = vld [vmem:[%s7 + $0x70] sm:$0xf]
  %v1840 = vld [vmem:[%s7 + $0x74] sm:$0xf]
  %v1841 = vld [vmem:[%s7 + $0x78] sm:$0xf]
  %v1842 = vld [vmem:[%s7 + $0x7c] sm:$0xf]
  %v1843 = vld [vmem:[%s8] sm:$0x1]
  %v1845 = vlaneseq
  %v1846 = vshrl.u32 %v1845, 7
  %v1847 = vsub.s32 0, %v1846
  %v1848 = vrot.slane %v1843, %v1847
  %v1882 = vunpack.c.l.b16 %v1811
  %v1883 = vunpack.c.l.b16 %v1812
  %v1884 = vunpack.c.l.b16 %v1813
  %v1885 = vunpack.c.l.b16 %v1814
  %v1886 = vunpack.c.l.b16 %v1815
  %v1887 = vunpack.c.l.b16 %v1816
  %v1888 = vunpack.c.l.b16 %v1817
  %v1889 = vunpack.c.l.b16 %v1818
  %v1890 = vunpack.c.l.b16 %v1819
  %v1891 = vunpack.c.l.b16 %v1820
  %v1892 = vunpack.c.l.b16 %v1821
  %v1893 = vunpack.c.l.b16 %v1822
  %v1894 = vunpack.c.l.b16 %v1823
  %v1895 = vunpack.c.l.b16 %v1824
  %v1896 = vunpack.c.l.b16 %v1825
  %v1897 = vunpack.c.l.b16 %v1826
  %v1898 = vunpack.c.l.b16 %v1827
  %v1899 = vunpack.c.l.b16 %v1828
  %v1900 = vunpack.c.l.b16 %v1829
  %v1901 = vunpack.c.l.b16 %v1830
  %v1902 = vunpack.c.l.b16 %v1831
  %v1903 = vunpack.c.l.b16 %v1832
  %v1904 = vunpack.c.l.b16 %v1833
  %v1905 = vunpack.c.l.b16 %v1834
  %v1906 = vunpack.c.l.b16 %v1835
  %v1907 = vunpack.c.l.b16 %v1836
  %v1908 = vunpack.c.l.b16 %v1837
  %v1909 = vunpack.c.l.b16 %v1838
  %v1910 = vunpack.c.l.b16 %v1839
  %v1911 = vunpack.c.l.b16 %v1840
  %v1912 = vunpack.c.l.b16 %v1841
  %v1913 = vunpack.c.l.b16 %v1842
  %v1914 = vpack.c.b16 %v1883, %v1882
  %v1915 = vpack.c.b16 %v1885, %v1884
  %v1916 = vpack.c.b16 %v1887, %v1886
  %v1917 = vpack.c.b16 %v1889, %v1888
  %v1918 = vpack.c.b16 %v1891, %v1890
  %v1919 = vpack.c.b16 %v1893, %v1892
  %v1920 = vpack.c.b16 %v1895, %v1894
  %v1921 = vpack.c.b16 %v1897, %v1896
  %v1922 = vpack.c.b16 %v1899, %v1898
  %v1923 = vpack.c.b16 %v1901, %v1900
  %v1924 = vpack.c.b16 %v1903, %v1902
  %v1925 = vpack.c.b16 %v1905, %v1904
  %v1926 = vpack.c.b16 %v1907, %v1906
  %v1927 = vpack.c.b16 %v1909, %v1908
  %v1928 = vpack.c.b16 %v1911, %v1910
  %v1929 = vpack.c.b16 %v1913, %v1912
  %1946 = vmatprep.subr.bf16.mxu0 0
  %1947 = vmatpush1.bf16.msra.mxu0 %v1921
  %1948 = vmatprep.subr.bf16.mxu0 0
  %1949 = vmatpush1.bf16.msra.mxu0 %v1920
  %1950 = vmatprep.subr.bf16.mxu0 0
  %1951 = vmatpush1.bf16.msra.mxu0 %v1919
  %1952 = vmatprep.subr.bf16.mxu0 0
  %1953 = vmatpush1.bf16.msra.mxu0 %v1918
  %1954 = vmatprep.subr.bf16.mxu0 0
  %1955 = vmatpush1.bf16.msra.mxu0 %v1917
  %1956 = vmatprep.subr.bf16.mxu0 0
  %1957 = vmatpush1.bf16.msra.mxu0 %v1916
  %1958 = vmatprep.subr.bf16.mxu0 0
  %1959 = vmatpush1.bf16.msra.mxu0 %v1915
  %1960 = vmatprep.subr.bf16.mxu0 0
  %1961 = vmatpush1.bf16.msra.mxu0 %v1914
  %1962 = vmatprep.subr.bf16.mxu0 0
  %1963 = vmatpush2.bf16.msra.mxu0 %v1929
  %1964 = vmatprep.subr.bf16.mxu0 0
  %1965 = vmatpush2.bf16.msra.mxu0 %v1928
  %1966 = vmatprep.subr.bf16.mxu0 0
  %1967 = vmatpush2.bf16.msra.mxu0 %v1927
  %1968 = vmatprep.subr.bf16.mxu0 0
  %1969 = vmatpush2.bf16.msra.mxu0 %v1926
  %1970 = vmatprep.subr.bf16.mxu0 0
  %1971 = vmatpush2.bf16.msra.mxu0 %v1925
  %1972 = vmatprep.subr.bf16.mxu0 0
  %1973 = vmatpush2.bf16.msra.mxu0 %v1924
  %1974 = vmatprep.subr.bf16.mxu0 0
  %1975 = vmatpush2.bf16.msra.mxu0 %v1923
  %1976 = vmatprep.subr.bf16.mxu0 0
  %1977 = vmatpush2.bf16.msra.mxu0 %v1922
  %1978 = vmatprep.mubr.bf16.mxu0 %v1810
  %1979 = vmatmul.mubr.bf16.gmra.mxu0 %v1809
  %v1980 = vpop.f32.mrf.mxu0
  %v1981 = vadd.f32 %v1848, %v1980
  %v1982 = vpop.f32.mrf.mxu0
  %v1983 = vpop.f32.mrf.mxu0
  %v1984 = vpop.f32.mrf.mxu0
  %1985 = vdwg.mxu0
  %vm1986 = vcmp.ge.f32.partialorder %v1981, 0.0
  %v1987 = vmul.f32 %v1981, 0.01
  %v1988 = vsel %vm1986, %v1981, %v1987
  %v1989 = vpack.c.bf16 %v1988, %v1988
  %v1990 = vld [vmem:[%s9] sm:$0xf]
  %v1991 = vld [vmem:[%s9 + $0x4] sm:$0xf]
  %v1992 = vld [vmem:[%s9 + $0x8] sm:$0xf]
  %v1993 = vld [vmem:[%s9 + $0xc] sm:$0xf]
  %v1994 = vld [vmem:[%s9 + $0x10] sm:$0xf]
  %v1995 = vld [vmem:[%s9 + $0x14] sm:$0xf]
  %v1996 = vld [vmem:[%s9 + $0x18] sm:$0xf]
  %v1997 = vld [vmem:[%s9 + $0x1c] sm:$0xf]
  %v1998 = vld [vmem:[%s9 + $0x20] sm:$0xf]
  %v1999 = vld [vmem:[%s9 + $0x24] sm:$0xf]
  %v2000 = vld [vmem:[%s9 + $0x28] sm:$0xf]
  %v2001 = vld [vmem:[%s9 + $0x2c] sm:$0xf]
  %v2002 = vld [vmem:[%s9 + $0x30] sm:$0xf]
  %v2003 = vld [vmem:[%s9 + $0x34] sm:$0xf]
  %v2004 = vld [vmem:[%s9 + $0x38] sm:$0xf]
  %v2005 = vld [vmem:[%s9 + $0x3c] sm:$0xf]
  %v2006 = vld [vmem:[%s10] sm:$0x1]
  %v2008 = vlaneseq
  %v2009 = vshrl.u32 %v2008, 7
  %v2010 = vsub.s32 0, %v2009
  %v2011 = vrot.slane %v2006, %v2010
  %v2029 = vunpack.c.l.b16 %v1990
  %v2030 = vunpack.c.l.b16 %v1991
  %v2031 = vunpack.c.l.b16 %v1992
  %v2032 = vunpack.c.l.b16 %v1993
  %v2033 = vunpack.c.l.b16 %v1994
  %v2034 = vunpack.c.l.b16 %v1995
  %v2035 = vunpack.c.l.b16 %v1996
  %v2036 = vunpack.c.l.b16 %v1997
  %v2037 = vunpack.c.l.b16 %v1998
  %v2038 = vunpack.c.l.b16 %v1999
  %v2039 = vunpack.c.l.b16 %v2000
  %v2040 = vunpack.c.l.b16 %v2001
  %v2041 = vunpack.c.l.b16 %v2002
  %v2042 = vunpack.c.l.b16 %v2003
  %v2043 = vunpack.c.l.b16 %v2004
  %v2044 = vunpack.c.l.b16 %v2005
  %v2045 = vpack.c.b16 %v2030, %v2029
  %v2046 = vpack.c.b16 %v2032, %v2031
  %v2047 = vpack.c.b16 %v2034, %v2033
  %v2048 = vpack.c.b16 %v2036, %v2035
  %v2049 = vpack.c.b16 %v2038, %v2037
  %v2050 = vpack.c.b16 %v2040, %v2039
  %v2051 = vpack.c.b16 %v2042, %v2041
  %v2052 = vpack.c.b16 %v2044, %v2043
  %2061 = vmatprep.subr.bf16.mxu0 0
  %2062 = vmatpush1.bf16.msra.mxu0 %v2052
  %2063 = vmatprep.subr.bf16.mxu0 0
  %2064 = vmatpush1.bf16.msra.mxu0 %v2051
  %2065 = vmatprep.subr.bf16.mxu0 0
  %2066 = vmatpush1.bf16.msra.mxu0 %v2050
  %2067 = vmatprep.subr.bf16.mxu0 0
  %2068 = vmatpush1.bf16.msra.mxu0 %v2049
  %2069 = vmatprep.subr.bf16.mxu0 0
  %2070 = vmatpush1.bf16.msra.mxu0 %v2048
  %2071 = vmatprep.subr.bf16.mxu0 0
  %2072 = vmatpush1.bf16.msra.mxu0 %v2047
  %2073 = vmatprep.subr.bf16.mxu0 0
  %2074 = vmatpush1.bf16.msra.mxu0 %v2046
  %2075 = vmatprep.subr.bf16.mxu0 0
  %2076 = vmatpush1.bf16.msra.mxu0 %v2045
  %2077 = vmatprep.subr.bf16.mxu0 0
  %2078 = vmatpush2.bf16.msra.mxu0 0
  %2079 = vmatprep.subr.bf16.mxu0 0
  %2080 = vmatpush2.bf16.msra.mxu0 0
  %2081 = vmatprep.subr.bf16.mxu0 0
  %2082 = vmatpush2.bf16.msra.mxu0 0
  %2083 = vmatprep.subr.bf16.mxu0 0
  %2084 = vmatpush2.bf16.msra.mxu0 0
  %2085 = vmatprep.subr.bf16.mxu0 0
  %2086 = vmatpush2.bf16.msra.mxu0 0
  %2087 = vmatprep.subr.bf16.mxu0 0
  %2088 = vmatpush2.bf16.msra.mxu0 0
  %2089 = vmatprep.subr.bf16.mxu0 0
  %2090 = vmatpush2.bf16.msra.mxu0 0
  %2091 = vmatprep.subr.bf16.mxu0 0
  %2092 = vmatpush2.bf16.msra.mxu0 0
  %2093 = vmatprep.mubr.bf16.mxu0 0
  %2094 = vmatmul.mubr.bf16.gmra.mxu0 %v1989
  %v2095 = vpop.f32.mrf.mxu0
  %v2096 = vadd.f32 %v2011, %v2095
  %v2097 = vpop.f32.mrf.mxu0
  %v2098 = vpop.f32.mrf.mxu0
  %v2099 = vpop.f32.mrf.mxu0
  %2100 = vdwg.mxu0
  %vm2101 = vcmp.ge.f32.partialorder %v2096, 0.0
  %v2102 = vmul.f32 %v2096, 0.01
  %v2103 = vsel %vm2101, %v2096, %v2102
  %v2104 = vpack.c.bf16 %v2103, %v2103
  %v2105 = vld [vmem:[%s11] sm:$0xf]
  %v2106 = vld [vmem:[%s11 + $0x4] sm:$0xf]
  %v2107 = vld [vmem:[%s11 + $0x8] sm:$0xf]
  %v2108 = vld [vmem:[%s11 + $0xc] sm:$0xf]
  %v2109 = vld [vmem:[%s11 + $0x10] sm:$0xf]
  %v2110 = vld [vmem:[%s11 + $0x14] sm:$0xf]
  %v2111 = vld [vmem:[%s11 + $0x18] sm:$0xf]
  %v2112 = vld [vmem:[%s11 + $0x1c] sm:$0xf]
  %v2113 = vld [vmem:[%s12] sm:$0x1]
  %v2115 = vlaneseq
  %v2116 = vshrl.u32 %v2115, 7
  %v2117 = vsub.s32 0, %v2116
  %v2118 = vrot.slane %v2113, %v2117
  %v2128 = vunpack.c.l.b16 %v2105
  %v2129 = vunpack.c.l.b16 %v2106
  %v2130 = vunpack.c.l.b16 %v2107
  %v2131 = vunpack.c.l.b16 %v2108
  %v2132 = vunpack.c.l.b16 %v2109
  %v2133 = vunpack.c.l.b16 %v2110
  %v2134 = vunpack.c.l.b16 %v2111
  %v2135 = vunpack.c.l.b16 %v2112
  %v2136 = vpack.c.b16 %v2129, %v2128
  %v2137 = vpack.c.b16 %v2131, %v2130
  %v2138 = vpack.c.b16 %v2133, %v2132
  %v2139 = vpack.c.b16 %v2135, %v2134
  %vm2144 = vcmask 523264
  %v2146 = vsel %vm2144, %v2104, 0
  %2148 = vmatprep.subr.bf16.mxu0 0
  %2149 = vmatpush1.bf16.msra.mxu0 0
  %2150 = vmatprep.subr.bf16.mxu0 0
  %2151 = vmatpush1.bf16.msra.mxu0 0
  %2152 = vmatprep.subr.bf16.mxu0 0
  %2153 = vmatpush1.bf16.msra.mxu0 0
  %2154 = vmatprep.subr.bf16.mxu0 0
  %2155 = vmatpush1.bf16.msra.mxu0 0
  %2156 = vmatprep.subr.bf16.mxu0 0
  %2157 = vmatpush1.bf16.msra.mxu0 %v2139
  %2158 = vmatprep.subr.bf16.mxu0 0
  %2159 = vmatpush1.bf16.msra.mxu0 %v2138
  %2160 = vmatprep.subr.bf16.mxu0 0
  %2161 = vmatpush1.bf16.msra.mxu0 %v2137
  %2162 = vmatprep.subr.bf16.mxu0 0
  %2163 = vmatpush1.bf16.msra.mxu0 %v2136
  %2164 = vmatprep.subr.bf16.mxu0 0
  %2165 = vmatpush2.bf16.msra.mxu0 0
  %2166 = vmatprep.subr.bf16.mxu0 0
  %2167 = vmatpush2.bf16.msra.mxu0 0
  %2168 = vmatprep.subr.bf16.mxu0 0
  %2169 = vmatpush2.bf16.msra.mxu0 0
  %2170 = vmatprep.subr.bf16.mxu0 0
  %2171 = vmatpush2.bf16.msra.mxu0 0
  %2172 = vmatprep.subr.bf16.mxu0 0
  %2173 = vmatpush2.bf16.msra.mxu0 0
  %2174 = vmatprep.subr.bf16.mxu0 0
  %2175 = vmatpush2.bf16.msra.mxu0 0
  %2176 = vmatprep.subr.bf16.mxu0 0
  %2177 = vmatpush2.bf16.msra.mxu0 0
  %2178 = vmatprep.subr.bf16.mxu0 0
  %2179 = vmatpush2.bf16.msra.mxu0 0
  %2180 = vmatprep.mubr.bf16.mxu0 0
  %2181 = vmatmul.mubr.bf16.gmra.mxu0 %v2146
  %v2182 = vpop.f32.mrf.mxu0
  %v2183 = vadd.f32 %v2118, %v2182
  %v2184 = vpop.f32.mrf.mxu0
  %v2185 = vpop.f32.mrf.mxu0
  %v2186 = vpop.f32.mrf.mxu0
  %2187 = vdwg.mxu0
  %2188 = vst [vmem:[%s13] sm:$0x3] %v2183
  // Predicated region
  $region54: #{gcn_forward.1} parent=0 // pred_check
    _
  $region55: #{gcn_forward.1} parent=0 // pred_check_branch
    %2190 = sbr.rel (0) target = $region57
  $region56: #{gcn_forward.1} parent=0 // pred_region
    _
  $region57: #{gcn_forward.1} parent=0 // pred_fallthru
    _
  // Predicated region
  $region58: #{gcn_forward.1} parent=0 // pred_check
    _
  $region59: #{gcn_forward.1} parent=0 // pred_check_branch
    %2192 = sbr.rel (0) target = $region61
  $region60: #{gcn_forward.1} parent=0 // pred_region
    _
  $region61: #{gcn_forward.1} parent=0 // pred_fallthru
    _

</llo_original>
